<compile_context>
chip_gen: v5e
topology: v5e:2x2
jax: 0.10.0
libtpu: 0.0.40
codegen_flags: <defaults>
</compile_context>

<pallas_src>
import jax
import jax.numpy as jnp
import numpy as np
from jax.experimental import pallas as pl
from jax.experimental.pallas import tpu as pltpu


def _round_up(x, m):
    return (x + m - 1) // m * m


def _pad2(a, rows, cols):
    r, c = a.shape
    if r == rows and c == cols:
        return a
    return jnp.pad(a, ((0, rows - r), (0, cols - c)))


# ----------------------------- fused Pallas kernel ---------------------------


def make_fused_forward_kernel(n_eps, n_th, rows, hidden, lanes, num_layers):
    """Builds the fused forward kernel (static shape parameters closed over)."""

    def kernel(
        # padded node features
        x_e_ref, x_t_ref,
        # input projections (already routed into the packed lane layout)
        wpe_ref, wpt_ref, bp_ref,
        # stacked mean-normalized adjacency [A_ee ; A_te ; A_et]
        a3_ref,
        # stacked per-layer routing weights / bias / BN params
        w1_ref, w2_ref, w3_ref, wr_ref, bl_ref, g_ref, be_ref,
        # packed output slab
        o_ref,
    ):
        # ---- hoisted masks / normalizers (built once, reused every layer) ----
        row = jax.lax.broadcasted_iota(jnp.int32, (rows, lanes), 0)
        lane = jax.lax.broadcasted_iota(jnp.int32, (rows, lanes), 1)
        mask = row < jnp.where(lane < hidden, n_eps, n_th)            # [rows, lanes]
        lane1 = jax.lax.broadcasted_iota(jnp.int32, (1, lanes), 1)
        inv_n = jnp.where(lane1 < hidden,
                          jnp.float32(1.0 / n_eps),
                          jnp.float32(1.0 / n_th))                    # [1, lanes]

        # ---- input projections -> packed slab (eps lanes 0:H, theta lanes H:2H) ----
        s = (jnp.dot(x_e_ref[...], wpe_ref[...], preferred_element_type=jnp.float32)
             + jnp.dot(x_t_ref[...], wpt_ref[...], preferred_element_type=jnp.float32)
             + bp_ref[...])

        a3 = a3_ref[...]                                              # [3*rows, rows]

        # ---- unrolled hetero-SAGE layers (static per-layer weight indexing) ----
        for l in range(num_layers):
            # one stacked aggregation matmul covers all three relations
            agg = jnp.dot(a3, s, preferred_element_type=jnp.float32)  # [3*rows, lanes]

            # HeteroConv(sum) of SAGEConvs: accumulated matmuls, no lane shuffles.
            out = (jnp.dot(agg[0:rows], w1_ref[l],
                           preferred_element_type=jnp.float32)        # (A_ee@h_e)@wl_ee -> eps
                   + jnp.dot(agg[rows:2 * rows], w2_ref[l],
                             preferred_element_type=jnp.float32)      # (A_te@h_t)@wl_te -> eps
                   + jnp.dot(agg[2 * rows:3 * rows], w3_ref[l],
                             preferred_element_type=jnp.float32)      # (A_et@h_e)@wl_et -> th
                   + jnp.dot(s, wr_ref[l],
                             preferred_element_type=jnp.float32)      # root terms (both types)
                   + bl_ref[l])

            # BatchNorm1d (training stats, masked two-pass) + ReLU on the packed slab
            hm = jnp.where(mask, out, 0.0)
            mean = jnp.sum(hm, axis=0, keepdims=True) * inv_n
            d = out - mean
            var = jnp.sum(jnp.where(mask, d * d, 0.0), axis=0, keepdims=True) * inv_n
            y = d * jax.lax.rsqrt(var + 1e-5) * g_ref[l] + be_ref[l]
            y = jnp.maximum(y, 0.0)
            # zero the pad rows so they never leak into the next layer's root term
            s = jnp.where(mask, y, 0.0)

        # ---- one unmasked lane-dense full-tile store ----
        o_ref[...] = s

    return kernel


# ----------------------------- pallas_call wrapper ---------------------------


@jax.jit
def hetero_graphsage_forward(x_eps, x_th, a_ee, a_te, a_et, params):
    """Full HeteroGraphSAGE forward in a single fused, single-step pallas_call."""
    (wp_e, bp_e), (wp_t, bp_t), layers = params
    num_layers = len(layers)
    n_eps, input_dim = x_eps.shape
    n_th = x_th.shape[0]
    hidden = wp_e.shape[1]

    rows = max(_round_up(n_eps, 8), _round_up(n_th, 8))
    lanes = max(128, _round_up(2 * hidden, 128))   # lane-dense packed activation/output width
    H = hidden

    # --- pad node axes / adjacencies (zero pads keep the math exact) ---
    x_eps_p = _pad2(x_eps, rows, input_dim)
    x_th_p = _pad2(x_th, rows, input_dim)
    a_ee_p = _pad2(a_ee, rows, rows)     # eps  <- eps    ('communicates')
    a_te_p = _pad2(a_te, rows, rows)     # eps  <- theta  ('rev_detects')
    a_et_p = _pad2(a_et, rows, rows)     # theta <- eps   ('detects')
    a3 = jnp.concatenate([a_ee_p, a_te_p, a_et_p], axis=0)    # [3*rows, rows]

    # --- route parameters into the packed 128-lane layout (wrapper-side glue) ---
    def place(block, r0, c0, shape):
        return jnp.zeros(shape, jnp.float32).at[r0:r0 + block.shape[0],
                                                c0:c0 + block.shape[1]].set(block)

    Wp_e = place(wp_e, 0, 0, (input_dim, lanes))
    Wp_t = place(wp_t, 0, H, (input_dim, lanes))
    Bp = place(bp_e, 0, 0, (1, lanes)) + place(bp_t, 0, H, (1, lanes))

    W1, W2, W3, Wr, Bl, G, Be = [], [], [], [], [], [], []
    for (wl_ee, bl_ee, wr_ee, wl_te, bl_te, wr_te, wl_et, bl_et, wr_et,
         g_eps, be_eps, g_th, be_th) in layers:
        W1.append(place(wl_ee, 0, 0, (lanes, lanes)))                 # agg_ee -> eps lanes
        W2.append(place(wl_te, H, 0, (lanes, lanes)))                 # agg_te -> eps lanes
        W3.append(place(wl_et, 0, H, (lanes, lanes)))                 # agg_et -> theta lanes
        Wr.append(place(wr_ee + wr_te, 0, 0, (lanes, lanes))
                  + place(wr_et, H, H, (lanes, lanes)))               # root terms, both types
        Bl.append(place(bl_ee + bl_te, 0, 0, (1, lanes))
                  + place(bl_et, 0, H, (1, lanes)))
        G.append(place(g_eps, 0, 0, (1, lanes)) + place(g_th, 0, H, (1, lanes)))
        Be.append(place(be_eps, 0, 0, (1, lanes)) + place(be_th, 0, H, (1, lanes)))
    W1, W2, W3, Wr = map(jnp.stack, (W1, W2, W3, Wr))
    Bl, G, Be = map(jnp.stack, (Bl, G, Be))

    kernel = make_fused_forward_kernel(n_eps, n_th, rows, hidden, lanes, num_layers)

    def const_spec(shape):
        n = len(shape)
        return pl.BlockSpec(shape, lambda i, n=n: (0,) * n)

    packed = pl.pallas_call(
        kernel,
        grid=(1,),
        in_specs=[
            const_spec(x_eps_p.shape), const_spec(x_th_p.shape),
            const_spec(Wp_e.shape), const_spec(Wp_t.shape), const_spec(Bp.shape),
            const_spec(a3.shape),
            const_spec(W1.shape), const_spec(W2.shape), const_spec(W3.shape),
            const_spec(Wr.shape), const_spec(Bl.shape),
            const_spec(G.shape), const_spec(Be.shape),
        ],
        out_specs=pl.BlockSpec((rows, lanes), lambda i: (0, 0)),
        out_shape=jax.ShapeDtypeStruct((rows, lanes), jnp.float32),
        compiler_params=pltpu.CompilerParams(dimension_semantics=("arbitrary",)),
    )(x_eps_p, x_th_p, Wp_e, Wp_t, Bp, a3, W1, W2, W3, Wr, Bl, G, Be)

    z_eps = packed[:n_eps, :hidden]
    z_th = packed[:n_th, hidden:2 * hidden]
    return z_eps, z_th


# ----------------------------- model glue ------------------------------------


def mean_adj(edge_index, n_src, n_dst):
    """Row-normalized adjacency A[dst, src] implementing PyG scatter-mean."""
    src, dst = edge_index[0], edge_index[1]
    a = jnp.zeros((n_dst, n_src), jnp.float32).at[dst, src].add(1.0)
    deg = a.sum(axis=1, keepdims=True)
    return a / jnp.maximum(deg, 1.0)


def init_params(key, input_dim, hidden_dim, num_layers):
    """Deterministic synthetic parameters matching the module's shapes."""
    def lin(k, din, dout, scale=0.1):
        kw, kb = jax.random.split(k)
        w = scale * jax.random.normal(kw, (din, dout), jnp.float32)
        b = scale * jax.random.normal(kb, (1, dout), jnp.float32)
        return w, b

    keys = jax.random.split(key, 2 + num_layers)
    wp_e, bp_e = lin(keys[0], input_dim, hidden_dim)
    wp_t, bp_t = lin(keys[1], input_dim, hidden_dim)

    layers = []
    for i in range(num_layers):
        lk = jax.random.split(keys[2 + i], 6)
        wl_ee, bl_ee = lin(lk[0], hidden_dim, hidden_dim)
        wr_ee, _ = lin(lk[1], hidden_dim, hidden_dim)          # lin_r: no bias
        wl_te, bl_te = lin(lk[2], hidden_dim, hidden_dim)
        wr_te, _ = lin(lk[3], hidden_dim, hidden_dim)
        wl_et, bl_et = lin(lk[4], hidden_dim, hidden_dim)
        wr_et, _ = lin(lk[5], hidden_dim, hidden_dim)
        g_eps = jnp.ones((1, hidden_dim), jnp.float32)
        be_eps = jnp.zeros((1, hidden_dim), jnp.float32)
        g_th = jnp.ones((1, hidden_dim), jnp.float32)
        be_th = jnp.zeros((1, hidden_dim), jnp.float32)
        layers.append(
            (wl_ee, bl_ee, wr_ee, wl_te, bl_te, wr_te, wl_et, bl_et, wr_et,
             g_eps, be_eps, g_th, be_th)
        )
    return (wp_e, bp_e), (wp_t, bp_t), layers


def reference_forward(x_eps, x_th, a_ee, a_te, a_et, params, num_layers):
    """Pure-JAX reference implementing identical semantics (unfused)."""
    (wp_e, bp_e), (wp_t, bp_t), layers = params
    h_eps = x_eps @ wp_e + bp_e
    h_th = x_th @ wp_t + bp_t

    def bn_relu(h, g, b):
        m = jnp.mean(h, axis=0, keepdims=True)
        v = jnp.mean((h - m) ** 2, axis=0, keepdims=True)
        return jnp.maximum((h - m) * jax.lax.rsqrt(v + 1e-5) * g + b, 0.0)

    for i in range(num_layers):
        (wl_ee, bl_ee, wr_ee, wl_te, bl_te, wr_te, wl_et, bl_et, wr_et,
         g_eps, be_eps, g_th, be_th) = layers[i]
        out_ee = (a_ee @ h_eps) @ wl_ee + bl_ee + h_eps @ wr_ee
        out_te = (a_te @ h_th) @ wl_te + bl_te + h_eps @ wr_te
        new_eps = out_ee + out_te
        new_th = (a_et @ h_eps) @ wl_et + bl_et + h_th @ wr_et
        h_eps = bn_relu(new_eps, g_eps, be_eps)
        h_th = bn_relu(new_th, g_th, be_th)
    return h_eps, h_th


# ----------------------------- main -------------------------------------------

if __name__ == "__main__":
    INPUT_DIM, HIDDEN_DIM, NUM_LAYERS = 4, 32, 3
    N_EPS, N_TH = 16, 12          # epsilon (sensor) / theta (marine entity) nodes
    E_EE, E_ET = 40, 48           # communicates / detects edge counts

    key = jax.random.PRNGKey(0)
    k_xe, k_xt, k_e1, k_e2, k_e3, k_e4, k_par = jax.random.split(key, 7)

    # node features [N, 4]  (x, y, dx, dy)
    x_eps = jax.random.normal(k_xe, (N_EPS, INPUT_DIM), jnp.float32)
    x_th = jax.random.normal(k_xt, (N_TH, INPUT_DIM), jnp.float32)

    # edge_index_dict (deterministic random graphs)
    edge_ee = jnp.stack(
        [jax.random.randint(k_e1, (E_EE,), 0, N_EPS),
         jax.random.randint(k_e2, (E_EE,), 0, N_EPS)])              # eps -> eps
    edge_et = jnp.stack(
        [jax.random.randint(k_e3, (E_ET,), 0, N_EPS),
         jax.random.randint(k_e4, (E_ET,), 0, N_TH)])               # eps -> theta
    edge_te = edge_et[::-1]                                         # theta -> eps (rev_detects)

    # dense mean-aggregation operators (glue; the matmuls happen inside the kernel)
    a_ee = mean_adj(edge_ee, N_EPS, N_EPS)   # [N_EPS, N_EPS]
    a_te = mean_adj(edge_te, N_TH, N_EPS)    # [N_EPS, N_TH]
    a_et = mean_adj(edge_et, N_EPS, N_TH)    # [N_TH, N_EPS]

    params = init_params(k_par, INPUT_DIM, HIDDEN_DIM, NUM_LAYERS)

    z_eps, z_th = hetero_graphsage_forward(x_eps, x_th, a_ee, a_te, a_et, params)
    jax.block_until_ready((z_eps, z_th))

    # correctness check vs. pure-JAX reference
    r_eps, r_th = reference_forward(x_eps, x_th, a_ee, a_te, a_et, params, NUM_LAYERS)
    np.testing.assert_allclose(np.asarray(z_eps), np.asarray(r_eps), rtol=1e-4, atol=1e-4)
    np.testing.assert_allclose(np.asarray(z_th), np.asarray(r_th), rtol=1e-4, atol=1e-4)

    # TODO(synk): decode()/predict() (gather + dot + sigmoid link scoring) kept out of the
    # kernel; only forward() is implemented in Pallas as required.
    print("KERNEL_OK")
</pallas_src>

<mosaic_0001>
module attributes {stable_mosaic.version = 11 : i64} {
  func.func @kernel(%arg0: i32, %arg1: memref<16x4xf32, #tpu.memory_space<vmem>>, %arg2: memref<16x4xf32, #tpu.memory_space<vmem>>, %arg3: memref<4x128xf32, #tpu.memory_space<vmem>>, %arg4: memref<4x128xf32, #tpu.memory_space<vmem>>, %arg5: memref<1x128xf32, #tpu.memory_space<vmem>>, %arg6: memref<48x16xf32, #tpu.memory_space<vmem>>, %arg7: memref<3x128x128xf32, #tpu.memory_space<vmem>>, %arg8: memref<3x128x128xf32, #tpu.memory_space<vmem>>, %arg9: memref<3x128x128xf32, #tpu.memory_space<vmem>>, %arg10: memref<3x128x128xf32, #tpu.memory_space<vmem>>, %arg11: memref<3x1x128xf32, #tpu.memory_space<vmem>>, %arg12: memref<3x1x128xf32, #tpu.memory_space<vmem>>, %arg13: memref<3x1x128xf32, #tpu.memory_space<vmem>>, %arg14: memref<16x128xf32, #tpu.memory_space<vmem>>) attributes {dimension_semantics = [#tpu.dimension_semantics<arbitrary>], iteration_bounds = array<i64: 1>, scalar_prefetch = 0 : i64, scratch_operands = 0 : i64, tpu.core_type = #tpu.core_type<tc>, window_params = [{pipeline_mode = #tpu.pipeline_mode<synchronous>, transform_indices = @transform_0, window_bounds = array<i64: 16, 4>}, {pipeline_mode = #tpu.pipeline_mode<synchronous>, transform_indices = @transform_1, window_bounds = array<i64: 16, 4>}, {pipeline_mode = #tpu.pipeline_mode<synchronous>, transform_indices = @transform_2, window_bounds = array<i64: 4, 128>}, {pipeline_mode = #tpu.pipeline_mode<synchronous>, transform_indices = @transform_3, window_bounds = array<i64: 4, 128>}, {pipeline_mode = #tpu.pipeline_mode<synchronous>, transform_indices = @transform_4, window_bounds = array<i64: 1, 128>}, {pipeline_mode = #tpu.pipeline_mode<synchronous>, transform_indices = @transform_5, window_bounds = array<i64: 48, 16>}, {pipeline_mode = #tpu.pipeline_mode<synchronous>, transform_indices = @transform_6, window_bounds = array<i64: 3, 128, 128>}, {pipeline_mode = #tpu.pipeline_mode<synchronous>, transform_indices = @transform_7, window_bounds = array<i64: 3, 128, 128>}, {pipeline_mode = #tpu.pipeline_mode<synchronous>, transform_indices = @transform_8, window_bounds = array<i64: 3, 128, 128>}, {pipeline_mode = #tpu.pipeline_mode<synchronous>, transform_indices = @transform_9, window_bounds = array<i64: 3, 128, 128>}, {pipeline_mode = #tpu.pipeline_mode<synchronous>, transform_indices = @transform_10, window_bounds = array<i64: 3, 1, 128>}, {pipeline_mode = #tpu.pipeline_mode<synchronous>, transform_indices = @transform_11, window_bounds = array<i64: 3, 1, 128>}, {pipeline_mode = #tpu.pipeline_mode<synchronous>, transform_indices = @transform_12, window_bounds = array<i64: 3, 1, 128>}, {pipeline_mode = #tpu.pipeline_mode<synchronous>, transform_indices = @transform_13, window_bounds = array<i64: 16, 128>}]} {
    %0 = tpu.iota {dimensions = array<i32: 0>} : vector<16x128xi32>
    %1 = tpu.iota {dimensions = array<i32: 1>} : vector<16x128xi32>
    %c32_i32 = arith.constant 32 : i32
    %2 = vector.broadcast %c32_i32 : i32 to vector<16x128xi32>
    %3 = arith.cmpi slt, %1, %2 : vector<16x128xi32>
    %c16_i32 = arith.constant 16 : i32
    %c12_i32 = arith.constant 12 : i32
    %4 = vector.broadcast %c16_i32 : i32 to vector<16x128xi32>
    %5 = vector.broadcast %c12_i32 : i32 to vector<16x128xi32>
    %6 = arith.select %3, %4, %5 : vector<16x128xi1>, vector<16x128xi32>
    %7 = arith.cmpi slt, %0, %6 : vector<16x128xi32>
    %8 = tpu.iota {dimensions = array<i32: 1>} : vector<1x128xi32>
    %c32_i32_0 = arith.constant 32 : i32
    %9 = vector.broadcast %c32_i32_0 : i32 to vector<1x128xi32>
    %10 = arith.cmpi slt, %8, %9 : vector<1x128xi32>
    %cst = arith.constant 6.250000e-02 : f32
    %cst_1 = arith.constant 0.0833333358 : f32
    %11 = vector.broadcast %cst : f32 to vector<1x128xf32>
    %12 = vector.broadcast %cst_1 : f32 to vector<1x128xf32>
    %13 = arith.select %10, %11, %12 : vector<1x128xi1>, vector<1x128xf32>
    %c0 = arith.constant 0 : index
    %c0_2 = arith.constant 0 : index
    %14 = vector.load %arg1[%c0, %c0_2] : memref<16x4xf32, #tpu.memory_space<vmem>>, vector<16x4xf32>
    %c0_3 = arith.constant 0 : index
    %c0_4 = arith.constant 0 : index
    %15 = vector.load %arg3[%c0_3, %c0_4] : memref<4x128xf32, #tpu.memory_space<vmem>>, vector<4x128xf32>
    %cst_5 = arith.constant dense<0.000000e+00> : vector<16x128xf32>
    %16 = tpu.matmul %14, %15, %cst_5 {dimension_numbers = #tpu.dot_dimension_numbers<[1], [0], [0], [1], [0, 0, 1, 1], [], []>} : vector<16x4xf32>, vector<4x128xf32>, vector<16x128xf32> -> vector<16x128xf32>
    %c0_6 = arith.constant 0 : index
    %c0_7 = arith.constant 0 : index
    %17 = vector.load %arg2[%c0_6, %c0_7] : memref<16x4xf32, #tpu.memory_space<vmem>>, vector<16x4xf32>
    %c0_8 = arith.constant 0 : index
    %c0_9 = arith.constant 0 : index
    %18 = vector.load %arg4[%c0_8, %c0_9] : memref<4x128xf32, #tpu.memory_space<vmem>>, vector<4x128xf32>
    %cst_10 = arith.constant dense<0.000000e+00> : vector<16x128xf32>
    %19 = tpu.matmul %17, %18, %cst_10 {dimension_numbers = #tpu.dot_dimension_numbers<[1], [0], [0], [1], [0, 0, 1, 1], [], []>} : vector<16x4xf32>, vector<4x128xf32>, vector<16x128xf32> -> vector<16x128xf32>
    %20 = arith.addf %16, %19 : vector<16x128xf32>
    %c0_11 = arith.constant 0 : index
    %c0_12 = arith.constant 0 : index
    %21 = vector.load %arg5[%c0_11, %c0_12] : memref<1x128xf32, #tpu.memory_space<vmem>>, vector<1x128xf32>
    %22 = vector.broadcast %21 : vector<1x128xf32> to vector<16x128xf32>
    %23 = arith.addf %20, %22 : vector<16x128xf32>
    %c0_13 = arith.constant 0 : index
    %c0_14 = arith.constant 0 : index
    %24 = vector.load %arg6[%c0_13, %c0_14] : memref<48x16xf32, #tpu.memory_space<vmem>>, vector<48x16xf32>
    %cst_15 = arith.constant dense<0.000000e+00> : vector<48x128xf32>
    %25 = tpu.matmul %24, %23, %cst_15 {dimension_numbers = #tpu.dot_dimension_numbers<[1], [0], [0], [1], [0, 0, 1, 1], [], []>} : vector<48x16xf32>, vector<16x128xf32>, vector<48x128xf32> -> vector<48x128xf32>
    %26 = vector.extract_strided_slice %25 {offsets = [0, 0], sizes = [16, 128], strides = [1, 1]} : vector<48x128xf32> to vector<16x128xf32>
    %c0_16 = arith.constant 0 : index
    %c0_17 = arith.constant 0 : index
    %c0_18 = arith.constant 0 : index
    %27 = vector.load %arg7[%c0_16, %c0_17, %c0_18] : memref<3x128x128xf32, #tpu.memory_space<vmem>>, vector<1x128x128xf32>
    %28 = vector.shape_cast %27 : vector<1x128x128xf32> to vector<128x128xf32>
    %cst_19 = arith.constant dense<0.000000e+00> : vector<16x128xf32>
    %29 = tpu.matmul %26, %28, %cst_19 {dimension_numbers = #tpu.dot_dimension_numbers<[1], [0], [0], [1], [0, 0, 1, 1], [], []>} : vector<16x128xf32>, vector<128x128xf32>, vector<16x128xf32> -> vector<16x128xf32>
    %30 = vector.extract_strided_slice %25 {offsets = [16, 0], sizes = [16, 128], strides = [1, 1]} : vector<48x128xf32> to vector<16x128xf32>
    %c0_20 = arith.constant 0 : index
    %c0_21 = arith.constant 0 : index
    %c0_22 = arith.constant 0 : index
    %31 = vector.load %arg8[%c0_20, %c0_21, %c0_22] : memref<3x128x128xf32, #tpu.memory_space<vmem>>, vector<1x128x128xf32>
    %32 = vector.shape_cast %31 : vector<1x128x128xf32> to vector<128x128xf32>
    %cst_23 = arith.constant dense<0.000000e+00> : vector<16x128xf32>
    %33 = tpu.matmul %30, %32, %cst_23 {dimension_numbers = #tpu.dot_dimension_numbers<[1], [0], [0], [1], [0, 0, 1, 1], [], []>} : vector<16x128xf32>, vector<128x128xf32>, vector<16x128xf32> -> vector<16x128xf32>
    %34 = arith.addf %29, %33 : vector<16x128xf32>
    %35 = vector.extract_strided_slice %25 {offsets = [32, 0], sizes = [16, 128], strides = [1, 1]} : vector<48x128xf32> to vector<16x128xf32>
    %c0_24 = arith.constant 0 : index
    %c0_25 = arith.constant 0 : index
    %c0_26 = arith.constant 0 : index
    %36 = vector.load %arg9[%c0_24, %c0_25, %c0_26] : memref<3x128x128xf32, #tpu.memory_space<vmem>>, vector<1x128x128xf32>
    %37 = vector.shape_cast %36 : vector<1x128x128xf32> to vector<128x128xf32>
    %cst_27 = arith.constant dense<0.000000e+00> : vector<16x128xf32>
    %38 = tpu.matmul %35, %37, %cst_27 {dimension_numbers = #tpu.dot_dimension_numbers<[1], [0], [0], [1], [0, 0, 1, 1], [], []>} : vector<16x128xf32>, vector<128x128xf32>, vector<16x128xf32> -> vector<16x128xf32>
    %39 = arith.addf %34, %38 : vector<16x128xf32>
    %c0_28 = arith.constant 0 : index
    %c0_29 = arith.constant 0 : index
    %c0_30 = arith.constant 0 : index
    %40 = vector.load %arg10[%c0_28, %c0_29, %c0_30] : memref<3x128x128xf32, #tpu.memory_space<vmem>>, vector<1x128x128xf32>
    %41 = vector.shape_cast %40 : vector<1x128x128xf32> to vector<128x128xf32>
    %cst_31 = arith.constant dense<0.000000e+00> : vector<16x128xf32>
    %42 = tpu.matmul %23, %41, %cst_31 {dimension_numbers = #tpu.dot_dimension_numbers<[1], [0], [0], [1], [0, 0, 1, 1], [], []>} : vector<16x128xf32>, vector<128x128xf32>, vector<16x128xf32> -> vector<16x128xf32>
    %43 = arith.addf %39, %42 : vector<16x128xf32>
    %c0_32 = arith.constant 0 : index
    %c0_33 = arith.constant 0 : index
    %c0_34 = arith.constant 0 : index
    %44 = vector.load %arg11[%c0_32, %c0_33, %c0_34] : memref<3x1x128xf32, #tpu.memory_space<vmem>>, vector<1x1x128xf32>
    %45 = vector.shape_cast %44 : vector<1x1x128xf32> to vector<1x128xf32>
    %46 = vector.broadcast %45 : vector<1x128xf32> to vector<16x128xf32>
    %47 = arith.addf %43, %46 : vector<16x128xf32>
    %cst_35 = arith.constant 0.000000e+00 : f32
    %48 = vector.broadcast %cst_35 : f32 to vector<16x128xf32>
    %49 = arith.select %7, %47, %48 : vector<16x128xi1>, vector<16x128xf32>
    %cst_36 = arith.constant dense<0.000000e+00> : vector<128xf32>
    %50 = vector.multi_reduction <add>, %49, %cst_36 [0] : vector<16x128xf32> to vector<128xf32>
    %51 = vector.shape_cast %50 : vector<128xf32> to vector<1x128xf32>
    %52 = arith.mulf %51, %13 : vector<1x128xf32>
    %53 = vector.broadcast %52 : vector<1x128xf32> to vector<16x128xf32>
    %54 = arith.subf %47, %53 : vector<16x128xf32>
    %55 = arith.mulf %54, %54 : vector<16x128xf32>
    %cst_37 = arith.constant 0.000000e+00 : f32
    %56 = vector.broadcast %cst_37 : f32 to vector<16x128xf32>
    %57 = arith.select %7, %55, %56 : vector<16x128xi1>, vector<16x128xf32>
    %cst_38 = arith.constant dense<0.000000e+00> : vector<128xf32>
    %58 = vector.multi_reduction <add>, %57, %cst_38 [0] : vector<16x128xf32> to vector<128xf32>
    %59 = vector.shape_cast %58 : vector<128xf32> to vector<1x128xf32>
    %60 = arith.mulf %59, %13 : vector<1x128xf32>
    %cst_39 = arith.constant 9.99999974E-6 : f32
    %61 = vector.broadcast %cst_39 : f32 to vector<1x128xf32>
    %62 = arith.addf %60, %61 : vector<1x128xf32>
    %63 = math.rsqrt %62 : vector<1x128xf32>
    %64 = vector.broadcast %63 : vector<1x128xf32> to vector<16x128xf32>
    %65 = arith.mulf %54, %64 : vector<16x128xf32>
    %c0_40 = arith.constant 0 : index
    %c0_41 = arith.constant 0 : index
    %c0_42 = arith.constant 0 : index
    %66 = vector.load %arg12[%c0_40, %c0_41, %c0_42] : memref<3x1x128xf32, #tpu.memory_space<vmem>>, vector<1x1x128xf32>
    %67 = vector.shape_cast %66 : vector<1x1x128xf32> to vector<1x128xf32>
    %68 = vector.broadcast %67 : vector<1x128xf32> to vector<16x128xf32>
    %69 = arith.mulf %65, %68 : vector<16x128xf32>
    %c0_43 = arith.constant 0 : index
    %c0_44 = arith.constant 0 : index
    %c0_45 = arith.constant 0 : index
    %70 = vector.load %arg13[%c0_43, %c0_44, %c0_45] : memref<3x1x128xf32, #tpu.memory_space<vmem>>, vector<1x1x128xf32>
    %71 = vector.shape_cast %70 : vector<1x1x128xf32> to vector<1x128xf32>
    %72 = vector.broadcast %71 : vector<1x128xf32> to vector<16x128xf32>
    %73 = arith.addf %69, %72 : vector<16x128xf32>
    %cst_46 = arith.constant 0.000000e+00 : f32
    %74 = vector.broadcast %cst_46 : f32 to vector<16x128xf32>
    %75 = arith.maximumf %73, %74 : vector<16x128xf32>
    %cst_47 = arith.constant 0.000000e+00 : f32
    %76 = vector.broadcast %cst_47 : f32 to vector<16x128xf32>
    %77 = arith.select %7, %75, %76 : vector<16x128xi1>, vector<16x128xf32>
    %cst_48 = arith.constant dense<0.000000e+00> : vector<48x128xf32>
    %78 = tpu.matmul %24, %77, %cst_48 {dimension_numbers = #tpu.dot_dimension_numbers<[1], [0], [0], [1], [0, 0, 1, 1], [], []>} : vector<48x16xf32>, vector<16x128xf32>, vector<48x128xf32> -> vector<48x128xf32>
    %79 = vector.extract_strided_slice %78 {offsets = [0, 0], sizes = [16, 128], strides = [1, 1]} : vector<48x128xf32> to vector<16x128xf32>
    %c1 = arith.constant 1 : index
    %c0_49 = arith.constant 0 : index
    %c0_50 = arith.constant 0 : index
    %80 = vector.load %arg7[%c1, %c0_49, %c0_50] : memref<3x128x128xf32, #tpu.memory_space<vmem>>, vector<1x128x128xf32>
    %81 = vector.shape_cast %80 : vector<1x128x128xf32> to vector<128x128xf32>
    %cst_51 = arith.constant dense<0.000000e+00> : vector<16x128xf32>
    %82 = tpu.matmul %79, %81, %cst_51 {dimension_numbers = #tpu.dot_dimension_numbers<[1], [0], [0], [1], [0, 0, 1, 1], [], []>} : vector<16x128xf32>, vector<128x128xf32>, vector<16x128xf32> -> vector<16x128xf32>
    %83 = vector.extract_strided_slice %78 {offsets = [16, 0], sizes = [16, 128], strides = [1, 1]} : vector<48x128xf32> to vector<16x128xf32>
    %c1_52 = arith.constant 1 : index
    %c0_53 = arith.constant 0 : index
    %c0_54 = arith.constant 0 : index
    %84 = vector.load %arg8[%c1_52, %c0_53, %c0_54] : memref<3x128x128xf32, #tpu.memory_space<vmem>>, vector<1x128x128xf32>
    %85 = vector.shape_cast %84 : vector<1x128x128xf32> to vector<128x128xf32>
    %cst_55 = arith.constant dense<0.000000e+00> : vector<16x128xf32>
    %86 = tpu.matmul %83, %85, %cst_55 {dimension_numbers = #tpu.dot_dimension_numbers<[1], [0], [0], [1], [0, 0, 1, 1], [], []>} : vector<16x128xf32>, vector<128x128xf32>, vector<16x128xf32> -> vector<16x128xf32>
    %87 = arith.addf %82, %86 : vector<16x128xf32>
    %88 = vector.extract_strided_slice %78 {offsets = [32, 0], sizes = [16, 128], strides = [1, 1]} : vector<48x128xf32> to vector<16x128xf32>
    %c1_56 = arith.constant 1 : index
    %c0_57 = arith.constant 0 : index
    %c0_58 = arith.constant 0 : index
    %89 = vector.load %arg9[%c1_56, %c0_57, %c0_58] : memref<3x128x128xf32, #tpu.memory_space<vmem>>, vector<1x128x128xf32>
    %90 = vector.shape_cast %89 : vector<1x128x128xf32> to vector<128x128xf32>
    %cst_59 = arith.constant dense<0.000000e+00> : vector<16x128xf32>
    %91 = tpu.matmul %88, %90, %cst_59 {dimension_numbers = #tpu.dot_dimension_numbers<[1], [0], [0], [1], [0, 0, 1, 1], [], []>} : vector<16x128xf32>, vector<128x128xf32>, vector<16x128xf32> -> vector<16x128xf32>
    %92 = arith.addf %87, %91 : vector<16x128xf32>
    %c1_60 = arith.constant 1 : index
    %c0_61 = arith.constant 0 : index
    %c0_62 = arith.constant 0 : index
    %93 = vector.load %arg10[%c1_60, %c0_61, %c0_62] : memref<3x128x128xf32, #tpu.memory_space<vmem>>, vector<1x128x128xf32>
    %94 = vector.shape_cast %93 : vector<1x128x128xf32> to vector<128x128xf32>
    %cst_63 = arith.constant dense<0.000000e+00> : vector<16x128xf32>
    %95 = tpu.matmul %77, %94, %cst_63 {dimension_numbers = #tpu.dot_dimension_numbers<[1], [0], [0], [1], [0, 0, 1, 1], [], []>} : vector<16x128xf32>, vector<128x128xf32>, vector<16x128xf32> -> vector<16x128xf32>
    %96 = arith.addf %92, %95 : vector<16x128xf32>
    %c1_64 = arith.constant 1 : index
    %c0_65 = arith.constant 0 : index
    %c0_66 = arith.constant 0 : index
    %97 = vector.load %arg11[%c1_64, %c0_65, %c0_66] : memref<3x1x128xf32, #tpu.memory_space<vmem>>, vector<1x1x128xf32>
    %98 = vector.shape_cast %97 : vector<1x1x128xf32> to vector<1x128xf32>
    %99 = vector.broadcast %98 : vector<1x128xf32> to vector<16x128xf32>
    %100 = arith.addf %96, %99 : vector<16x128xf32>
    %cst_67 = arith.constant 0.000000e+00 : f32
    %101 = vector.broadcast %cst_67 : f32 to vector<16x128xf32>
    %102 = arith.select %7, %100, %101 : vector<16x128xi1>, vector<16x128xf32>
    %cst_68 = arith.constant dense<0.000000e+00> : vector<128xf32>
    %103 = vector.multi_reduction <add>, %102, %cst_68 [0] : vector<16x128xf32> to vector<128xf32>
    %104 = vector.shape_cast %103 : vector<128xf32> to vector<1x128xf32>
    %105 = arith.mulf %104, %13 : vector<1x128xf32>
    %106 = vector.broadcast %105 : vector<1x128xf32> to vector<16x128xf32>
    %107 = arith.subf %100, %106 : vector<16x128xf32>
    %108 = arith.mulf %107, %107 : vector<16x128xf32>
    %cst_69 = arith.constant 0.000000e+00 : f32
    %109 = vector.broadcast %cst_69 : f32 to vector<16x128xf32>
    %110 = arith.select %7, %108, %109 : vector<16x128xi1>, vector<16x128xf32>
    %cst_70 = arith.constant dense<0.000000e+00> : vector<128xf32>
    %111 = vector.multi_reduction <add>, %110, %cst_70 [0] : vector<16x128xf32> to vector<128xf32>
    %112 = vector.shape_cast %111 : vector<128xf32> to vector<1x128xf32>
    %113 = arith.mulf %112, %13 : vector<1x128xf32>
    %cst_71 = arith.constant 9.99999974E-6 : f32
    %114 = vector.broadcast %cst_71 : f32 to vector<1x128xf32>
    %115 = arith.addf %113, %114 : vector<1x128xf32>
    %116 = math.rsqrt %115 : vector<1x128xf32>
    %117 = vector.broadcast %116 : vector<1x128xf32> to vector<16x128xf32>
    %118 = arith.mulf %107, %117 : vector<16x128xf32>
    %c1_72 = arith.constant 1 : index
    %c0_73 = arith.constant 0 : index
    %c0_74 = arith.constant 0 : index
    %119 = vector.load %arg12[%c1_72, %c0_73, %c0_74] : memref<3x1x128xf32, #tpu.memory_space<vmem>>, vector<1x1x128xf32>
    %120 = vector.shape_cast %119 : vector<1x1x128xf32> to vector<1x128xf32>
    %121 = vector.broadcast %120 : vector<1x128xf32> to vector<16x128xf32>
    %122 = arith.mulf %118, %121 : vector<16x128xf32>
    %c1_75 = arith.constant 1 : index
    %c0_76 = arith.constant 0 : index
    %c0_77 = arith.constant 0 : index
    %123 = vector.load %arg13[%c1_75, %c0_76, %c0_77] : memref<3x1x128xf32, #tpu.memory_space<vmem>>, vector<1x1x128xf32>
    %124 = vector.shape_cast %123 : vector<1x1x128xf32> to vector<1x128xf32>
    %125 = vector.broadcast %124 : vector<1x128xf32> to vector<16x128xf32>
    %126 = arith.addf %122, %125 : vector<16x128xf32>
    %cst_78 = arith.constant 0.000000e+00 : f32
    %127 = vector.broadcast %cst_78 : f32 to vector<16x128xf32>
    %128 = arith.maximumf %126, %127 : vector<16x128xf32>
    %cst_79 = arith.constant 0.000000e+00 : f32
    %129 = vector.broadcast %cst_79 : f32 to vector<16x128xf32>
    %130 = arith.select %7, %128, %129 : vector<16x128xi1>, vector<16x128xf32>
    %cst_80 = arith.constant dense<0.000000e+00> : vector<48x128xf32>
    %131 = tpu.matmul %24, %130, %cst_80 {dimension_numbers = #tpu.dot_dimension_numbers<[1], [0], [0], [1], [0, 0, 1, 1], [], []>} : vector<48x16xf32>, vector<16x128xf32>, vector<48x128xf32> -> vector<48x128xf32>
    %132 = vector.extract_strided_slice %131 {offsets = [0, 0], sizes = [16, 128], strides = [1, 1]} : vector<48x128xf32> to vector<16x128xf32>
    %c2 = arith.constant 2 : index
    %c0_81 = arith.constant 0 : index
    %c0_82 = arith.constant 0 : index
    %133 = vector.load %arg7[%c2, %c0_81, %c0_82] : memref<3x128x128xf32, #tpu.memory_space<vmem>>, vector<1x128x128xf32>
    %134 = vector.shape_cast %133 : vector<1x128x128xf32> to vector<128x128xf32>
    %cst_83 = arith.constant dense<0.000000e+00> : vector<16x128xf32>
    %135 = tpu.matmul %132, %134, %cst_83 {dimension_numbers = #tpu.dot_dimension_numbers<[1], [0], [0], [1], [0, 0, 1, 1], [], []>} : vector<16x128xf32>, vector<128x128xf32>, vector<16x128xf32> -> vector<16x128xf32>
    %136 = vector.extract_strided_slice %131 {offsets = [16, 0], sizes = [16, 128], strides = [1, 1]} : vector<48x128xf32> to vector<16x128xf32>
    %c2_84 = arith.constant 2 : index
    %c0_85 = arith.constant 0 : index
    %c0_86 = arith.constant 0 : index
    %137 = vector.load %arg8[%c2_84, %c0_85, %c0_86] : memref<3x128x128xf32, #tpu.memory_space<vmem>>, vector<1x128x128xf32>
    %138 = vector.shape_cast %137 : vector<1x128x128xf32> to vector<128x128xf32>
    %cst_87 = arith.constant dense<0.000000e+00> : vector<16x128xf32>
    %139 = tpu.matmul %136, %138, %cst_87 {dimension_numbers = #tpu.dot_dimension_numbers<[1], [0], [0], [1], [0, 0, 1, 1], [], []>} : vector<16x128xf32>, vector<128x128xf32>, vector<16x128xf32> -> vector<16x128xf32>
    %140 = arith.addf %135, %139 : vector<16x128xf32>
    %141 = vector.extract_strided_slice %131 {offsets = [32, 0], sizes = [16, 128], strides = [1, 1]} : vector<48x128xf32> to vector<16x128xf32>
    %c2_88 = arith.constant 2 : index
    %c0_89 = arith.constant 0 : index
    %c0_90 = arith.constant 0 : index
    %142 = vector.load %arg9[%c2_88, %c0_89, %c0_90] : memref<3x128x128xf32, #tpu.memory_space<vmem>>, vector<1x128x128xf32>
    %143 = vector.shape_cast %142 : vector<1x128x128xf32> to vector<128x128xf32>
    %cst_91 = arith.constant dense<0.000000e+00> : vector<16x128xf32>
    %144 = tpu.matmul %141, %143, %cst_91 {dimension_numbers = #tpu.dot_dimension_numbers<[1], [0], [0], [1], [0, 0, 1, 1], [], []>} : vector<16x128xf32>, vector<128x128xf32>, vector<16x128xf32> -> vector<16x128xf32>
    %145 = arith.addf %140, %144 : vector<16x128xf32>
    %c2_92 = arith.constant 2 : index
    %c0_93 = arith.constant 0 : index
    %c0_94 = arith.constant 0 : index
    %146 = vector.load %arg10[%c2_92, %c0_93, %c0_94] : memref<3x128x128xf32, #tpu.memory_space<vmem>>, vector<1x128x128xf32>
    %147 = vector.shape_cast %146 : vector<1x128x128xf32> to vector<128x128xf32>
    %cst_95 = arith.constant dense<0.000000e+00> : vector<16x128xf32>
    %148 = tpu.matmul %130, %147, %cst_95 {dimension_numbers = #tpu.dot_dimension_numbers<[1], [0], [0], [1], [0, 0, 1, 1], [], []>} : vector<16x128xf32>, vector<128x128xf32>, vector<16x128xf32> -> vector<16x128xf32>
    %149 = arith.addf %145, %148 : vector<16x128xf32>
    %c2_96 = arith.constant 2 : index
    %c0_97 = arith.constant 0 : index
    %c0_98 = arith.constant 0 : index
    %150 = vector.load %arg11[%c2_96, %c0_97, %c0_98] : memref<3x1x128xf32, #tpu.memory_space<vmem>>, vector<1x1x128xf32>
    %151 = vector.shape_cast %150 : vector<1x1x128xf32> to vector<1x128xf32>
    %152 = vector.broadcast %151 : vector<1x128xf32> to vector<16x128xf32>
    %153 = arith.addf %149, %152 : vector<16x128xf32>
    %cst_99 = arith.constant 0.000000e+00 : f32
    %154 = vector.broadcast %cst_99 : f32 to vector<16x128xf32>
    %155 = arith.select %7, %153, %154 : vector<16x128xi1>, vector<16x128xf32>
    %cst_100 = arith.constant dense<0.000000e+00> : vector<128xf32>
    %156 = vector.multi_reduction <add>, %155, %cst_100 [0] : vector<16x128xf32> to vector<128xf32>
    %157 = vector.shape_cast %156 : vector<128xf32> to vector<1x128xf32>
    %158 = arith.mulf %157, %13 : vector<1x128xf32>
    %159 = vector.broadcast %158 : vector<1x128xf32> to vector<16x128xf32>
    %160 = arith.subf %153, %159 : vector<16x128xf32>
    %161 = arith.mulf %160, %160 : vector<16x128xf32>
    %cst_101 = arith.constant 0.000000e+00 : f32
    %162 = vector.broadcast %cst_101 : f32 to vector<16x128xf32>
    %163 = arith.select %7, %161, %162 : vector<16x128xi1>, vector<16x128xf32>
    %cst_102 = arith.constant dense<0.000000e+00> : vector<128xf32>
    %164 = vector.multi_reduction <add>, %163, %cst_102 [0] : vector<16x128xf32> to vector<128xf32>
    %165 = vector.shape_cast %164 : vector<128xf32> to vector<1x128xf32>
    %166 = arith.mulf %165, %13 : vector<1x128xf32>
    %cst_103 = arith.constant 9.99999974E-6 : f32
    %167 = vector.broadcast %cst_103 : f32 to vector<1x128xf32>
    %168 = arith.addf %166, %167 : vector<1x128xf32>
    %169 = math.rsqrt %168 : vector<1x128xf32>
    %170 = vector.broadcast %169 : vector<1x128xf32> to vector<16x128xf32>
    %171 = arith.mulf %160, %170 : vector<16x128xf32>
    %c2_104 = arith.constant 2 : index
    %c0_105 = arith.constant 0 : index
    %c0_106 = arith.constant 0 : index
    %172 = vector.load %arg12[%c2_104, %c0_105, %c0_106] : memref<3x1x128xf32, #tpu.memory_space<vmem>>, vector<1x1x128xf32>
    %173 = vector.shape_cast %172 : vector<1x1x128xf32> to vector<1x128xf32>
    %174 = vector.broadcast %173 : vector<1x128xf32> to vector<16x128xf32>
    %175 = arith.mulf %171, %174 : vector<16x128xf32>
    %c2_107 = arith.constant 2 : index
    %c0_108 = arith.constant 0 : index
    %c0_109 = arith.constant 0 : index
    %176 = vector.load %arg13[%c2_107, %c0_108, %c0_109] : memref<3x1x128xf32, #tpu.memory_space<vmem>>, vector<1x1x128xf32>
    %177 = vector.shape_cast %176 : vector<1x1x128xf32> to vector<1x128xf32>
    %178 = vector.broadcast %177 : vector<1x128xf32> to vector<16x128xf32>
    %179 = arith.addf %175, %178 : vector<16x128xf32>
    %cst_110 = arith.constant 0.000000e+00 : f32
    %180 = vector.broadcast %cst_110 : f32 to vector<16x128xf32>
    %181 = arith.maximumf %179, %180 : vector<16x128xf32>
    %cst_111 = arith.constant 0.000000e+00 : f32
    %182 = vector.broadcast %cst_111 : f32 to vector<16x128xf32>
    %183 = arith.select %7, %181, %182 : vector<16x128xi1>, vector<16x128xf32>
    %c0_112 = arith.constant 0 : index
    %c0_113 = arith.constant 0 : index
    %184 = vector.load %arg14[%c0_112, %c0_113] : memref<16x128xf32, #tpu.memory_space<vmem>>, vector<16x128xf32>
    tpu.vector_store %arg14[%c0_112, %c0_113], %183 {strides = array<i32>} : memref<16x128xf32, #tpu.memory_space<vmem>>, vector<16x128xf32>,
    return
  }
  func.func @transform_0(%arg0: i32) -> (i32, i32) {
    %c0_i32 = arith.constant 0 : i32
    %c0_i32_0 = arith.constant 0 : i32
    %c0_i32_1 = arith.constant 0 : i32
    return %c0_i32, %c0_i32_0 : i32, i32
  }
  func.func @transform_1(%arg0: i32) -> (i32, i32) {
    %c0_i32 = arith.constant 0 : i32
    %c0_i32_0 = arith.constant 0 : i32
    %c0_i32_1 = arith.constant 0 : i32
    return %c0_i32, %c0_i32_0 : i32, i32
  }
  func.func @transform_2(%arg0: i32) -> (i32, i32) {
    %c0_i32 = arith.constant 0 : i32
    %c0_i32_0 = arith.constant 0 : i32
    %c0_i32_1 = arith.constant 0 : i32
    return %c0_i32, %c0_i32_0 : i32, i32
  }
  func.func @transform_3(%arg0: i32) -> (i32, i32) {
    %c0_i32 = arith.constant 0 : i32
    %c0_i32_0 = arith.constant 0 : i32
    %c0_i32_1 = arith.constant 0 : i32
    return %c0_i32, %c0_i32_0 : i32, i32
  }
  func.func @transform_4(%arg0: i32) -> (i32, i32) {
    %c0_i32 = arith.constant 0 : i32
    %c0_i32_0 = arith.constant 0 : i32
    %c0_i32_1 = arith.constant 0 : i32
    return %c0_i32, %c0_i32_0 : i32, i32
  }
  func.func @transform_5(%arg0: i32) -> (i32, i32) {
    %c0_i32 = arith.constant 0 : i32
    %c0_i32_0 = arith.constant 0 : i32
    %c0_i32_1 = arith.constant 0 : i32
    return %c0_i32, %c0_i32_0 : i32, i32
  }
  func.func @transform_6(%arg0: i32) -> (i32, i32, i32) {
    %c0_i32 = arith.constant 0 : i32
    %c0_i32_0 = arith.constant 0 : i32
    %c0_i32_1 = arith.constant 0 : i32
    %c0_i32_2 = arith.constant 0 : i32
    return %c0_i32, %c0_i32_0, %c0_i32_1 : i32, i32, i32
  }
  func.func @transform_7(%arg0: i32) -> (i32, i32, i32) {
    %c0_i32 = arith.constant 0 : i32
    %c0_i32_0 = arith.constant 0 : i32
    %c0_i32_1 = arith.constant 0 : i32
    %c0_i32_2 = arith.constant 0 : i32
    return %c0_i32, %c0_i32_0, %c0_i32_1 : i32, i32, i32
  }
  func.func @transform_8(%arg0: i32) -> (i32, i32, i32) {
    %c0_i32 = arith.constant 0 : i32
    %c0_i32_0 = arith.constant 0 : i32
    %c0_i32_1 = arith.constant 0 : i32
    %c0_i32_2 = arith.constant 0 : i32
    return %c0_i32, %c0_i32_0, %c0_i32_1 : i32, i32, i32
  }
  func.func @transform_9(%arg0: i32) -> (i32, i32, i32) {
    %c0_i32 = arith.constant 0 : i32
    %c0_i32_0 = arith.constant 0 : i32
    %c0_i32_1 = arith.constant 0 : i32
    %c0_i32_2 = arith.constant 0 : i32
    return %c0_i32, %c0_i32_0, %c0_i32_1 : i32, i32, i32
  }
  func.func @transform_10(%arg0: i32) -> (i32, i32, i32) {
    %c0_i32 = arith.constant 0 : i32
    %c0_i32_0 = arith.constant 0 : i32
    %c0_i32_1 = arith.constant 0 : i32
    %c0_i32_2 = arith.constant 0 : i32
    return %c0_i32, %c0_i32_0, %c0_i32_1 : i32, i32, i32
  }
  func.func @transform_11(%arg0: i32) -> (i32, i32, i32) {
    %c0_i32 = arith.constant 0 : i32
    %c0_i32_0 = arith.constant 0 : i32
    %c0_i32_1 = arith.constant 0 : i32
    %c0_i32_2 = arith.constant 0 : i32
    return %c0_i32, %c0_i32_0, %c0_i32_1 : i32, i32, i32
  }
  func.func @transform_12(%arg0: i32) -> (i32, i32, i32) {
    %c0_i32 = arith.constant 0 : i32
    %c0_i32_0 = arith.constant 0 : i32
    %c0_i32_1 = arith.constant 0 : i32
    %c0_i32_2 = arith.constant 0 : i32
    return %c0_i32, %c0_i32_0, %c0_i32_1 : i32, i32, i32
  }
  func.func @transform_13(%arg0: i32) -> (i32, i32) {
    %c0_i32 = arith.constant 0 : i32
    %c0_i32_0 = arith.constant 0 : i32
    %c0_i32_1 = arith.constant 0 : i32
    return %c0_i32, %c0_i32_0 : i32, i32
  }
}

</mosaic_0001>

<llo_original>
// kernel: hetero_graphsage_forward.1
$region0: #{hetero_graphsage_forward.1}
  #allocation0 [shape = 'u32[]', space=smem, size = 0x4, offset = 0x4, fixed_abs, tag = 'smem constant byte address 0x4 - core index']
  #allocation1 [shape = 'u32[72,128]{1,0:T(1,128)}', space=vmem, size = 0x9000, scoped, tag = 'internal scratch']
  %s0 = inlined_call_operand.vmem [shape: f32[16,4], index: 0, kind: input, shape index: {}]
  %s1 = inlined_call_operand.vmem [shape: f32[16,4], index: 1, kind: input, shape index: {}]
  %s2 = inlined_call_operand.vmem [shape: f32[4,128], index: 2, kind: input, shape index: {}]
  %s3 = inlined_call_operand.vmem [shape: f32[4,128], index: 3, kind: input, shape index: {}]
  %s4 = inlined_call_operand.vmem [shape: f32[1,128], index: 4, kind: input, shape index: {}]
  %s5 = inlined_call_operand.vmem [shape: f32[48,16], index: 5, kind: input, shape index: {}]
  %s6 = inlined_call_operand.vmem [shape: f32[3,128,128], index: 6, kind: input, shape index: {}]
  %s7 = inlined_call_operand.vmem [shape: f32[3,128,128], index: 7, kind: input, shape index: {}]
  %s8 = inlined_call_operand.vmem [shape: f32[3,128,128], index: 8, kind: input, shape index: {}]
  %s9 = inlined_call_operand.vmem [shape: f32[3,128,128], index: 9, kind: input, shape index: {}]
  %s10 = inlined_call_operand.vmem [shape: f32[3,1,128], index: 10, kind: input, shape index: {}]
  %s11 = inlined_call_operand.vmem [shape: f32[3,1,128], index: 11, kind: input, shape index: {}]
  %s12 = inlined_call_operand.vmem [shape: f32[3,1,128], index: 12, kind: input, shape index: {}]
  %s13 = inlined_call_operand.vmem [shape: f32[16,128], index: 13, kind: output, shape index: {}]
  %s14 = sld [smem:[#allocation0]]
  $region62: #{hetero_graphsage_forward.1} parent=0
    _
  %s16 = ssub.s32 1, %s14
  %s17 = scalar_select 0, %s16, %s14
  // Predicated region
  $region2: #{hetero_graphsage_forward.1} parent=0 // pred_check
    _
  $region3: #{hetero_graphsage_forward.1} parent=0 // pred_check_branch
    %19 = sbr.rel (0) target = $region5
  $region4: #{hetero_graphsage_forward.1} parent=0 // pred_region
    _
  $region5: #{hetero_graphsage_forward.1} parent=0 // pred_fallthru
    _
  // Predicated region
  $region6: #{hetero_graphsage_forward.1} parent=0 // pred_check
    _
  $region7: #{hetero_graphsage_forward.1} parent=0 // pred_check_branch
    %21 = sbr.rel (0) target = $region9
  $region8: #{hetero_graphsage_forward.1} parent=0 // pred_region
    _
  $region9: #{hetero_graphsage_forward.1} parent=0 // pred_fallthru
    _
  // Predicated region
  $region10: #{hetero_graphsage_forward.1} parent=0 // pred_check
    _
  $region11: #{hetero_graphsage_forward.1} parent=0 // pred_check_branch
    %23 = sbr.rel (0) target = $region13
  $region12: #{hetero_graphsage_forward.1} parent=0 // pred_region
    _
  $region13: #{hetero_graphsage_forward.1} parent=0 // pred_fallthru
    _
  // Predicated region
  $region14: #{hetero_graphsage_forward.1} parent=0 // pred_check
    _
  $region15: #{hetero_graphsage_forward.1} parent=0 // pred_check_branch
    %25 = sbr.rel (0) target = $region17
  $region16: #{hetero_graphsage_forward.1} parent=0 // pred_region
    _
  $region17: #{hetero_graphsage_forward.1} parent=0 // pred_fallthru
    _
  // Predicated region
  $region18: #{hetero_graphsage_forward.1} parent=0 // pred_check
    _
  $region19: #{hetero_graphsage_forward.1} parent=0 // pred_check_branch
    %27 = sbr.rel (0) target = $region21
  $region20: #{hetero_graphsage_forward.1} parent=0 // pred_region
    _
  $region21: #{hetero_graphsage_forward.1} parent=0 // pred_fallthru
    _
  // Predicated region
  $region22: #{hetero_graphsage_forward.1} parent=0 // pred_check
    _
  $region23: #{hetero_graphsage_forward.1} parent=0 // pred_check_branch
    %29 = sbr.rel (0) target = $region25
  $region24: #{hetero_graphsage_forward.1} parent=0 // pred_region
    _
  $region25: #{hetero_graphsage_forward.1} parent=0 // pred_fallthru
    _
  // Predicated region
  $region26: #{hetero_graphsage_forward.1} parent=0 // pred_check
    _
  $region27: #{hetero_graphsage_forward.1} parent=0 // pred_check_branch
    %31 = sbr.rel (0) target = $region29
  $region28: #{hetero_graphsage_forward.1} parent=0 // pred_region
    _
  $region29: #{hetero_graphsage_forward.1} parent=0 // pred_fallthru
    _
  // Predicated region
  $region30: #{hetero_graphsage_forward.1} parent=0 // pred_check
    _
  $region31: #{hetero_graphsage_forward.1} parent=0 // pred_check_branch
    %33 = sbr.rel (0) target = $region33
  $region32: #{hetero_graphsage_forward.1} parent=0 // pred_region
    _
  $region33: #{hetero_graphsage_forward.1} parent=0 // pred_fallthru
    _
  // Predicated region
  $region34: #{hetero_graphsage_forward.1} parent=0 // pred_check
    _
  $region35: #{hetero_graphsage_forward.1} parent=0 // pred_check_branch
    %35 = sbr.rel (0) target = $region37
  $region36: #{hetero_graphsage_forward.1} parent=0 // pred_region
    _
  $region37: #{hetero_graphsage_forward.1} parent=0 // pred_fallthru
    _
  // Predicated region
  $region38: #{hetero_graphsage_forward.1} parent=0 // pred_check
    _
  $region39: #{hetero_graphsage_forward.1} parent=0 // pred_check_branch
    %37 = sbr.rel (0) target = $region41
  $region40: #{hetero_graphsage_forward.1} parent=0 // pred_region
    _
  $region41: #{hetero_graphsage_forward.1} parent=0 // pred_fallthru
    _
  // Predicated region
  $region42: #{hetero_graphsage_forward.1} parent=0 // pred_check
    _
  $region43: #{hetero_graphsage_forward.1} parent=0 // pred_check_branch
    %39 = sbr.rel (0) target = $region45
  $region44: #{hetero_graphsage_forward.1} parent=0 // pred_region
    _
  $region45: #{hetero_graphsage_forward.1} parent=0 // pred_fallthru
    _
  // Predicated region
  $region46: #{hetero_graphsage_forward.1} parent=0 // pred_check
    _
  $region47: #{hetero_graphsage_forward.1} parent=0 // pred_check_branch
    %41 = sbr.rel (0) target = $region49
  $region48: #{hetero_graphsage_forward.1} parent=0 // pred_region
    _
  $region49: #{hetero_graphsage_forward.1} parent=0 // pred_fallthru
    _
  // Predicated region
  $region50: #{hetero_graphsage_forward.1} parent=0 // pred_check
    _
  $region51: #{hetero_graphsage_forward.1} parent=0 // pred_check_branch
    %43 = sbr.rel (0) target = $region53
  $region52: #{hetero_graphsage_forward.1} parent=0 // pred_region
    _
  $region53: #{hetero_graphsage_forward.1} parent=0 // pred_fallthru
    _
  %v44 = vlaneseq
  %v45 = vshrl.u32 %v44, 7
  %v46 = vadd.s32 %v45, 8
  %v47 = vlaneseq
  %v48 = vand.u32 %v47, 127
  %vm49 = vcmp.lt.s32.totalorder %v48, 32
  %v50 = vsel %vm49, 16, 12
  %vm51 = vcmp.lt.s32.totalorder %v45, %v50
  %vm52 = vcmp.lt.s32.totalorder %v46, %v50
  %v53 = vsel %vm49, 0.0625, 0.083333336
  %v54 = vld [vmem:[%s0] sm:$0xff]
  %v55 = vld [vmem:[%s0 + $0x8] sm:$0xff]
  %v56 = vld [vmem:[%s2] sm:$0xf]
  %v57 = vld [vmem:[%s1] sm:$0xff]
  %v58 = vld [vmem:[%s1 + $0x8] sm:$0xff]
  %v59 = vld [vmem:[%s3] sm:$0xf]
  %vm60 = vcmask 31744
  %v62 = vsel %vm60, %v57, 0
  %v65 = vsel %vm60, %v58, 0
  %vm67 = vcmask 1043456
  %v69 = vsel %vm67, %v59, 0
  %71 = vmatpush.msra.mxu0 0.0
  %72 = vmatpush.msra.mxu0 0.0
  %73 = vmatpush.msra.mxu0 0.0
  %74 = vmatpush.msra.mxu0 0.0
  %75 = vmatpush.msra.mxu0 0.0
  %76 = vmatpush.msra.mxu0 0.0
  %77 = vmatpush.msra.mxu0 0.0
  %78 = vmatpush.msra.mxu0 0.0
  %79 = vmatpush.msra.mxu0 0.0
  %80 = vmatpush.msra.mxu0 0.0
  %81 = vmatpush.msra.mxu0 0.0
  %82 = vmatpush.msra.mxu0 0.0
  %83 = vmatpush.msra.mxu0 0.0
  %84 = vmatpush.msra.mxu0 0.0
  %85 = vmatpush.msra.mxu0 0.0
  %86 = vmatpush.msra.mxu0 %v69
  %87 = vmatmul.f32.gmra.mxu0 %v62
  %v88 = vpop.f32.mrf.mxu0
  %v89 = vadd.f32 0.0, %v88
  %90 = vmatmul.f32.gmra.mxu0 %v65
  %v91 = vpop.f32.mrf.mxu0
  %v92 = vadd.f32 0.0, %v91
  %93 = vdwg.mxu0
  %v95 = vsel %vm60, %v54, 0
  %v98 = vsel %vm60, %v55, 0
  %v101 = vsel %vm67, %v56, 0
  %103 = vmatpush.msra.mxu0 0.0
  %104 = vmatpush.msra.mxu0 0.0
  %105 = vmatpush.msra.mxu0 0.0
  %106 = vmatpush.msra.mxu0 0.0
  %107 = vmatpush.msra.mxu0 0.0
  %108 = vmatpush.msra.mxu0 0.0
  %109 = vmatpush.msra.mxu0 0.0
  %110 = vmatpush.msra.mxu0 0.0
  %111 = vmatpush.msra.mxu0 0.0
  %112 = vmatpush.msra.mxu0 0.0
  %113 = vmatpush.msra.mxu0 0.0
  %114 = vmatpush.msra.mxu0 0.0
  %115 = vmatpush.msra.mxu0 0.0
  %116 = vmatpush.msra.mxu0 0.0
  %117 = vmatpush.msra.mxu0 0.0
  %118 = vmatpush.msra.mxu0 %v101
  %119 = vmatmul.f32.gmra.mxu0 %v95
  %v120 = vpop.f32.mrf.mxu0
  %v121 = vadd.f32 %v89, %v120
  %122 = vmatmul.f32.gmra.mxu0 %v98
  %v123 = vpop.f32.mrf.mxu0
  %v124 = vadd.f32 %v92, %v123
  %125 = vdwg.mxu0
  %v126 = vld [vmem:[%s4] sm:$0x1]
  %v128 = vperm.slane %v126, 0
  %v130 = vadd.f32 %v121, %v128
  %v131 = vadd.f32 %v124, %v128
  %v132 = vld [vmem:[%s5] sm:$0xff]
  %v133 = vld [vmem:[%s5 + $0x8] sm:$0xff]
  %v134 = vld [vmem:[%s5 + $0x10] sm:$0xff]
  %v135 = vld [vmem:[%s5 + $0x18] sm:$0xff]
  %v136 = vld [vmem:[%s5 + $0x20] sm:$0xff]
  %v137 = vld [vmem:[%s5 + $0x28] sm:$0xff]
  %vm138 = vcmask 130048
  %v140 = vsel %vm138, %v132, 0
  %v143 = vsel %vm138, %v133, 0
  %v146 = vsel %vm138, %v134, 0
  %v149 = vsel %vm138, %v135, 0
  %v152 = vsel %vm138, %v136, 0
  %v155 = vsel %vm138, %v137, 0
  %157 = vmatpush.msra.mxu0 0.0
  %158 = vmatpush.msra.mxu0 0.0
  %159 = vmatpush.msra.mxu0 0.0
  %160 = vmatpush.msra.mxu0 0.0
  %161 = vmatpush.msra.mxu0 0.0
  %162 = vmatpush.msra.mxu0 0.0
  %163 = vmatpush.msra.mxu0 0.0
  %164 = vmatpush.msra.mxu0 0.0
  %165 = vmatpush.msra.mxu0 0.0
  %166 = vmatpush.msra.mxu0 0.0
  %167 = vmatpush.msra.mxu0 0.0
  %168 = vmatpush.msra.mxu0 0.0
  %169 = vmatpush.msra.mxu0 0.0
  %170 = vmatpush.msra.mxu0 0.0
  %171 = vmatpush.msra.mxu0 %v131
  %172 = vmatpush.msra.mxu0 %v130
  %173 = vmatmul.f32.gmra.mxu0 %v140
  %v174 = vpop.f32.mrf.mxu0
  %v175 = vadd.f32 0.0, %v174
  %176 = vmatmul.f32.gmra.mxu0 %v143
  %v177 = vpop.f32.mrf.mxu0
  %v178 = vadd.f32 0.0, %v177
  %179 = vmatmul.f32.gmra.mxu0 %v146
  %v180 = vpop.f32.mrf.mxu0
  %v181 = vadd.f32 0.0, %v180
  %182 = vmatmul.f32.gmra.mxu0 %v149
  %v183 = vpop.f32.mrf.mxu0
  %v184 = vadd.f32 0.0, %v183
  %185 = vmatmul.f32.gmra.mxu0 %v152
  %v186 = vpop.f32.mrf.mxu0
  %v187 = vadd.f32 0.0, %v186
  %188 = vmatmul.f32.gmra.mxu0 %v155
  %v189 = vpop.f32.mrf.mxu0
  %v190 = vadd.f32 0.0, %v189
  %191 = vdwg.mxu0
  %v192 = vld [vmem:[%s6] sm:$0xff]
  %v193 = vld [vmem:[%s6 + $0x8] sm:$0xff]
  %v194 = vld [vmem:[%s6 + $0x10] sm:$0xff]
  %v195 = vld [vmem:[%s6 + $0x18] sm:$0xff]
  %v196 = vld [vmem:[%s6 + $0x20] sm:$0xff]
  %v197 = vld [vmem:[%s6 + $0x28] sm:$0xff]
  %v198 = vld [vmem:[%s6 + $0x30] sm:$0xff]
  %v199 = vld [vmem:[%s6 + $0x38] sm:$0xff]
  %v200 = vld [vmem:[%s6 + $0x40] sm:$0xff]
  %v201 = vld [vmem:[%s6 + $0x48] sm:$0xff]
  %v202 = vld [vmem:[%s6 + $0x50] sm:$0xff]
  %v203 = vld [vmem:[%s6 + $0x58] sm:$0xff]
  %v204 = vld [vmem:[%s6 + $0x60] sm:$0xff]
  %v205 = vld [vmem:[%s6 + $0x68] sm:$0xff]
  %v206 = vld [vmem:[%s6 + $0x70] sm:$0xff]
  %v207 = vld [vmem:[%s6 + $0x78] sm:$0xff]
  %v208 = vld [vmem:[%s7] sm:$0xff]
  %v209 = vld [vmem:[%s7 + $0x8] sm:$0xff]
  %v210 = vld [vmem:[%s7 + $0x10] sm:$0xff]
  %v211 = vld [vmem:[%s7 + $0x18] sm:$0xff]
  %v212 = vld [vmem:[%s7 + $0x20] sm:$0xff]
  %v213 = vld [vmem:[%s7 + $0x28] sm:$0xff]
  %v214 = vld [vmem:[%s7 + $0x30] sm:$0xff]
  %v215 = vld [vmem:[%s7 + $0x38] sm:$0xff]
  %v216 = vld [vmem:[%s7 + $0x40] sm:$0xff]
  %v217 = vld [vmem:[%s7 + $0x48] sm:$0xff]
  %v218 = vld [vmem:[%s7 + $0x50] sm:$0xff]
  %v219 = vld [vmem:[%s7 + $0x58] sm:$0xff]
  %v220 = vld [vmem:[%s7 + $0x60] sm:$0xff]
  %v221 = vld [vmem:[%s7 + $0x68] sm:$0xff]
  %v222 = vld [vmem:[%s7 + $0x70] sm:$0xff]
  %v223 = vld [vmem:[%s7 + $0x78] sm:$0xff]
  %224 = vmatpush.msra.mxu0 %v223
  %225 = vmatpush.msra.mxu0 %v222
  %226 = vmatpush.msra.mxu0 %v221
  %227 = vmatpush.msra.mxu0 %v220
  %228 = vmatpush.msra.mxu0 %v219
  %229 = vmatpush.msra.mxu0 %v218
  %230 = vmatpush.msra.mxu0 %v217
  %231 = vmatpush.msra.mxu0 %v216
  %232 = vmatpush.msra.mxu0 %v215
  %233 = vmatpush.msra.mxu0 %v214
  %234 = vmatpush.msra.mxu0 %v213
  %235 = vmatpush.msra.mxu0 %v212
  %236 = vmatpush.msra.mxu0 %v211
  %237 = vmatpush.msra.mxu0 %v210
  %238 = vmatpush.msra.mxu0 %v209
  %239 = vmatpush.msra.mxu0 %v208
  %240 = vmatmul.f32.gmra.mxu0 %v181
  %v241 = vpop.f32.mrf.mxu0
  %v242 = vadd.f32 0.0, %v241
  %243 = vmatmul.f32.gmra.mxu0 %v184
  %v244 = vpop.f32.mrf.mxu0
  %v245 = vadd.f32 0.0, %v244
  %246 = vdwg.mxu0
  %247 = vmatpush.msra.mxu0 %v207
  %248 = vmatpush.msra.mxu0 %v206
  %249 = vmatpush.msra.mxu0 %v205
  %250 = vmatpush.msra.mxu0 %v204
  %251 = vmatpush.msra.mxu0 %v203
  %252 = vmatpush.msra.mxu0 %v202
  %253 = vmatpush.msra.mxu0 %v201
  %254 = vmatpush.msra.mxu0 %v200
  %255 = vmatpush.msra.mxu0 %v199
  %256 = vmatpush.msra.mxu0 %v198
  %257 = vmatpush.msra.mxu0 %v197
  %258 = vmatpush.msra.mxu0 %v196
  %259 = vmatpush.msra.mxu0 %v195
  %260 = vmatpush.msra.mxu0 %v194
  %261 = vmatpush.msra.mxu0 %v193
  %262 = vmatpush.msra.mxu0 %v192
  %263 = vmatmul.f32.gmra.mxu0 %v175
  %v264 = vpop.f32.mrf.mxu0
  %v265 = vadd.f32 %v242, %v264
  %266 = vmatmul.f32.gmra.mxu0 %v178
  %v267 = vpop.f32.mrf.mxu0
  %v268 = vadd.f32 %v245, %v267
  %269 = vdwg.mxu0
  %v270 = vld [vmem:[%s8] sm:$0xff]
  %v271 = vld [vmem:[%s8 + $0x8] sm:$0xff]
  %v272 = vld [vmem:[%s8 + $0x10] sm:$0xff]
  %v273 = vld [vmem:[%s8 + $0x18] sm:$0xff]
  %v274 = vld [vmem:[%s8 + $0x20] sm:$0xff]
  %v275 = vld [vmem:[%s8 + $0x28] sm:$0xff]
  %v276 = vld [vmem:[%s8 + $0x30] sm:$0xff]
  %v277 = vld [vmem:[%s8 + $0x38] sm:$0xff]
  %v278 = vld [vmem:[%s8 + $0x40] sm:$0xff]
  %v279 = vld [vmem:[%s8 + $0x48] sm:$0xff]
  %v280 = vld [vmem:[%s8 + $0x50] sm:$0xff]
  %v281 = vld [vmem:[%s8 + $0x58] sm:$0xff]
  %v282 = vld [vmem:[%s8 + $0x60] sm:$0xff]
  %v283 = vld [vmem:[%s8 + $0x68] sm:$0xff]
  %v284 = vld [vmem:[%s8 + $0x70] sm:$0xff]
  %v285 = vld [vmem:[%s8 + $0x78] sm:$0xff]
  %286 = vmatpush.msra.mxu0 %v285
  %287 = vmatpush.msra.mxu0 %v284
  %288 = vmatpush.msra.mxu0 %v283
  %289 = vmatpush.msra.mxu0 %v282
  %290 = vmatpush.msra.mxu0 %v281
  %291 = vmatpush.msra.mxu0 %v280
  %292 = vmatpush.msra.mxu0 %v279
  %293 = vmatpush.msra.mxu0 %v278
  %294 = vmatpush.msra.mxu0 %v277
  %295 = vmatpush.msra.mxu0 %v276
  %296 = vmatpush.msra.mxu0 %v275
  %297 = vmatpush.msra.mxu0 %v274
  %298 = vmatpush.msra.mxu0 %v273
  %299 = vmatpush.msra.mxu0 %v272
  %300 = vmatpush.msra.mxu0 %v271
  %301 = vmatpush.msra.mxu0 %v270
  %302 = vmatmul.f32.gmra.mxu0 %v187
  %v303 = vpop.f32.mrf.mxu0
  %v304 = vadd.f32 0.0, %v303
  %305 = vmatmul.f32.gmra.mxu0 %v190
  %v306 = vpop.f32.mrf.mxu0
  %v307 = vadd.f32 0.0, %v306
  %308 = vdwg.mxu0
  %v309 = vadd.f32 %v265, %v304
  %v310 = vadd.f32 %v268, %v307
  %v311 = vld [vmem:[%s9] sm:$0xff]
  %v312 = vld [vmem:[%s9 + $0x8] sm:$0xff]
  %v313 = vld [vmem:[%s9 + $0x10] sm:$0xff]
  %v314 = vld [vmem:[%s9 + $0x18] sm:$0xff]
  %v315 = vld [vmem:[%s9 + $0x20] sm:$0xff]
  %v316 = vld [vmem:[%s9 + $0x28] sm:$0xff]
  %v317 = vld [vmem:[%s9 + $0x30] sm:$0xff]
  %v318 = vld [vmem:[%s9 + $0x38] sm:$0xff]
  %v319 = vld [vmem:[%s9 + $0x40] sm:$0xff]
  %v320 = vld [vmem:[%s9 + $0x48] sm:$0xff]
  %v321 = vld [vmem:[%s9 + $0x50] sm:$0xff]
  %v322 = vld [vmem:[%s9 + $0x58] sm:$0xff]
  %v323 = vld [vmem:[%s9 + $0x60] sm:$0xff]
  %v324 = vld [vmem:[%s9 + $0x68] sm:$0xff]
  %v325 = vld [vmem:[%s9 + $0x70] sm:$0xff]
  %v326 = vld [vmem:[%s9 + $0x78] sm:$0xff]
  %327 = vmatpush.msra.mxu0 %v326
  %328 = vmatpush.msra.mxu0 %v325
  %329 = vmatpush.msra.mxu0 %v324
  %330 = vmatpush.msra.mxu0 %v323
  %331 = vmatpush.msra.mxu0 %v322
  %332 = vmatpush.msra.mxu0 %v321
  %333 = vmatpush.msra.mxu0 %v320
  %334 = vmatpush.msra.mxu0 %v319
  %335 = vmatpush.msra.mxu0 %v318
  %336 = vmatpush.msra.mxu0 %v317
  %337 = vmatpush.msra.mxu0 %v316
  %338 = vmatpush.msra.mxu0 %v315
  %339 = vmatpush.msra.mxu0 %v314
  %340 = vmatpush.msra.mxu0 %v313
  %341 = vmatpush.msra.mxu0 %v312
  %342 = vmatpush.msra.mxu0 %v311
  %343 = vmatmul.f32.gmra.mxu0 %v130
  %v344 = vpop.f32.mrf.mxu0
  %v345 = vadd.f32 0.0, %v344
  %346 = vmatmul.f32.gmra.mxu0 %v131
  %v347 = vpop.f32.mrf.mxu0
  %v348 = vadd.f32 0.0, %v347
  %349 = vdwg.mxu0
  %v350 = vadd.f32 %v309, %v345
  %v351 = vadd.f32 %v310, %v348
  %v352 = vld [vmem:[%s10] sm:$0x1]
  %v354 = vperm.slane %v352, 0
  %v356 = vadd.f32 %v350, %v354
  %v357 = vadd.f32 %v351, %v354
  %v358 = vsel %vm51, %v356, 0.0
  %v359 = vsel %vm52, %v357, 0.0
  %v360 = vadd.f32 %v358, %v359
  %v361 = vrot.slane %v360, 4
  %v362 = vadd.f32 %v360, %v361
  %v363 = vrot.slane %v362, 2
  %v364 = vadd.f32 %v362, %v363
  %v365 = vrot.slane %v364, 1
  %v366 = vadd.f32 %v364, %v365
  %v367 = vmul.f32 %v366, %v53
  %v368 = vsub.f32 %v356, %v367
  %v369 = vsub.f32 %v357, %v367
  %v370 = vmul.f32 %v368, %v368
  %v371 = vmul.f32 %v369, %v369
  %v372 = vsel %vm51, %v370, 0.0
  %v373 = vsel %vm52, %v371, 0.0
  %v374 = vadd.f32 %v372, %v373
  %v375 = vrot.slane %v374, 4
  %v376 = vadd.f32 %v374, %v375
  %v377 = vrot.slane %v376, 2
  %v378 = vadd.f32 %v376, %v377
  %v379 = vrot.slane %v378, 1
  %v380 = vadd.f32 %v378, %v379
  %v381 = vmul.f32 %v380, %v53
  %v382 = vadd.f32 %v381, 1e-05
  %v383 = vrsqrt.pop %v382
  %v384 = vmul.f32 %v383, %v382
  %v385 = vmul.f32 %v384, %v383
  %v386 = vmul.f32 0.5, %v385
  %v387 = vsub.f32 1.5, %v386
  %v388 = vmul.f32 %v383, %v387
  %vm389 = vweird.f32 %v382
  %vm390 = vweird.f32 %v383
  %vm391 = vmor %vm389, %vm390
  %v392 = vsel %vm391, %v383, %v388
  %v393 = vmul.f32 %v368, %v392
  %v394 = vmul.f32 %v369, %v392
  %v395 = vld [vmem:[%s11] sm:$0x1]
  %v397 = vperm.slane %v395, 0
  %v399 = vmul.f32 %v393, %v397
  %v400 = vmul.f32 %v394, %v397
  %v401 = vld [vmem:[%s12] sm:$0x1]
  %v403 = vperm.slane %v401, 0
  %v405 = vadd.f32 %v399, %v403
  %v406 = vadd.f32 %v400, %v403
  %v407 = vmax.f32 %v405, 0.0
  %v408 = vmax.f32 %v406, 0.0
  %v409 = vsel %vm51, %v407, 0.0
  %v410 = vsel %vm52, %v408, 0.0
  %411 = vmatpush.msra.mxu0 0.0
  %412 = vmatpush.msra.mxu0 0.0
  %413 = vmatpush.msra.mxu0 0.0
  %414 = vmatpush.msra.mxu0 0.0
  %415 = vmatpush.msra.mxu0 0.0
  %416 = vmatpush.msra.mxu0 0.0
  %417 = vmatpush.msra.mxu0 0.0
  %418 = vmatpush.msra.mxu0 0.0
  %419 = vmatpush.msra.mxu0 0.0
  %420 = vmatpush.msra.mxu0 0.0
  %421 = vmatpush.msra.mxu0 0.0
  %422 = vmatpush.msra.mxu0 0.0
  %423 = vmatpush.msra.mxu0 0.0
  %424 = vmatpush.msra.mxu0 0.0
  %425 = vmatpush.msra.mxu0 %v410
  %426 = vmatpush.msra.mxu0 %v409
  %427 = vmatmul.f32.gmra.mxu0 %v140
  %v428 = vpop.f32.mrf.mxu0
  %v429 = vadd.f32 0.0, %v428
  %430 = vmatmul.f32.gmra.mxu0 %v143
  %v431 = vpop.f32.mrf.mxu0
  %v432 = vadd.f32 0.0, %v431
  %433 = vmatmul.f32.gmra.mxu0 %v146
  %v434 = vpop.f32.mrf.mxu0
  %v435 = vadd.f32 0.0, %v434
  %436 = vmatmul.f32.gmra.mxu0 %v149
  %v437 = vpop.f32.mrf.mxu0
  %v438 = vadd.f32 0.0, %v437
  %439 = vmatmul.f32.gmra.mxu0 %v152
  %v440 = vpop.f32.mrf.mxu0
  %v441 = vadd.f32 0.0, %v440
  %442 = vmatmul.f32.gmra.mxu0 %v155
  %v443 = vpop.f32.mrf.mxu0
  %v444 = vadd.f32 0.0, %v443
  %445 = vdwg.mxu0
  %s446 = scalar_lea.vmem %s6, 128
  %v447 = vld [vmem:[%s446] sm:$0xff]
  %v448 = vld [vmem:[%s446 + $0x8] sm:$0xff]
  %v449 = vld [vmem:[%s446 + $0x10] sm:$0xff]
  %v450 = vld [vmem:[%s446 + $0x18] sm:$0xff]
  %v451 = vld [vmem:[%s446 + $0x20] sm:$0xff]
  %v452 = vld [vmem:[%s446 + $0x28] sm:$0xff]
  %v453 = vld [vmem:[%s446 + $0x30] sm:$0xff]
  %v454 = vld [vmem:[%s446 + $0x38] sm:$0xff]
  %v455 = vld [vmem:[%s446 + $0x40] sm:$0xff]
  %v456 = vld [vmem:[%s446 + $0x48] sm:$0xff]
  %v457 = vld [vmem:[%s446 + $0x50] sm:$0xff]
  %v458 = vld [vmem:[%s446 + $0x58] sm:$0xff]
  %v459 = vld [vmem:[%s446 + $0x60] sm:$0xff]
  %v460 = vld [vmem:[%s446 + $0x68] sm:$0xff]
  %v461 = vld [vmem:[%s446 + $0x70] sm:$0xff]
  %v462 = vld [vmem:[%s446 + $0x78] sm:$0xff]
  %s463 = scalar_lea.vmem %s7, 128
  %v464 = vld [vmem:[%s463] sm:$0xff]
  %v465 = vld [vmem:[%s463 + $0x8] sm:$0xff]
  %v466 = vld [vmem:[%s463 + $0x10] sm:$0xff]
  %v467 = vld [vmem:[%s463 + $0x18] sm:$0xff]
  %v468 = vld [vmem:[%s463 + $0x20] sm:$0xff]
  %v469 = vld [vmem:[%s463 + $0x28] sm:$0xff]
  %v470 = vld [vmem:[%s463 + $0x30] sm:$0xff]
  %v471 = vld [vmem:[%s463 + $0x38] sm:$0xff]
  %v472 = vld [vmem:[%s463 + $0x40] sm:$0xff]
  %v473 = vld [vmem:[%s463 + $0x48] sm:$0xff]
  %v474 = vld [vmem:[%s463 + $0x50] sm:$0xff]
  %v475 = vld [vmem:[%s463 + $0x58] sm:$0xff]
  %v476 = vld [vmem:[%s463 + $0x60] sm:$0xff]
  %v477 = vld [vmem:[%s463 + $0x68] sm:$0xff]
  %v478 = vld [vmem:[%s463 + $0x70] sm:$0xff]
  %v479 = vld [vmem:[%s463 + $0x78] sm:$0xff]
  %480 = vmatpush.msra.mxu0 %v479
  %481 = vmatpush.msra.mxu0 %v478
  %482 = vmatpush.msra.mxu0 %v477
  %483 = vmatpush.msra.mxu0 %v476
  %484 = vmatpush.msra.mxu0 %v475
  %485 = vmatpush.msra.mxu0 %v474
  %486 = vmatpush.msra.mxu0 %v473
  %487 = vmatpush.msra.mxu0 %v472
  %488 = vmatpush.msra.mxu0 %v471
  %489 = vmatpush.msra.mxu0 %v470
  %490 = vmatpush.msra.mxu0 %v469
  %491 = vmatpush.msra.mxu0 %v468
  %492 = vmatpush.msra.mxu0 %v467
  %493 = vmatpush.msra.mxu0 %v466
  %494 = vmatpush.msra.mxu0 %v465
  %495 = vmatpush.msra.mxu0 %v464
  %496 = vmatmul.f32.gmra.mxu0 %v435
  %v497 = vpop.f32.mrf.mxu0
  %v498 = vadd.f32 0.0, %v497
  %499 = vmatmul.f32.gmra.mxu0 %v438
  %v500 = vpop.f32.mrf.mxu0
  %v501 = vadd.f32 0.0, %v500
  %502 = vdwg.mxu0
  %503 = vmatpush.msra.mxu0 %v462
  %504 = vmatpush.msra.mxu0 %v461
  %505 = vmatpush.msra.mxu0 %v460
  %506 = vmatpush.msra.mxu0 %v459
  %507 = vmatpush.msra.mxu0 %v458
  %508 = vmatpush.msra.mxu0 %v457
  %509 = vmatpush.msra.mxu0 %v456
  %510 = vmatpush.msra.mxu0 %v455
  %511 = vmatpush.msra.mxu0 %v454
  %512 = vmatpush.msra.mxu0 %v453
  %513 = vmatpush.msra.mxu0 %v452
  %514 = vmatpush.msra.mxu0 %v451
  %515 = vmatpush.msra.mxu0 %v450
  %516 = vmatpush.msra.mxu0 %v449
  %517 = vmatpush.msra.mxu0 %v448
  %518 = vmatpush.msra.mxu0 %v447
  %519 = vmatmul.f32.gmra.mxu0 %v429
  %v520 = vpop.f32.mrf.mxu0
  %v521 = vadd.f32 %v498, %v520
  %522 = vmatmul.f32.gmra.mxu0 %v432
  %v523 = vpop.f32.mrf.mxu0
  %v524 = vadd.f32 %v501, %v523
  %525 = vdwg.mxu0
  %s526 = scalar_lea.vmem %s8, 128
  %v527 = vld [vmem:[%s526] sm:$0xff]
  %v528 = vld [vmem:[%s526 + $0x8] sm:$0xff]
  %v529 = vld [vmem:[%s526 + $0x10] sm:$0xff]
  %v530 = vld [vmem:[%s526 + $0x18] sm:$0xff]
  %v531 = vld [vmem:[%s526 + $0x20] sm:$0xff]
  %v532 = vld [vmem:[%s526 + $0x28] sm:$0xff]
  %v533 = vld [vmem:[%s526 + $0x30] sm:$0xff]
  %v534 = vld [vmem:[%s526 + $0x38] sm:$0xff]
  %v535 = vld [vmem:[%s526 + $0x40] sm:$0xff]
  %v536 = vld [vmem:[%s526 + $0x48] sm:$0xff]
  %v537 = vld [vmem:[%s526 + $0x50] sm:$0xff]
  %v538 = vld [vmem:[%s526 + $0x58] sm:$0xff]
  %v539 = vld [vmem:[%s526 + $0x60] sm:$0xff]
  %v540 = vld [vmem:[%s526 + $0x68] sm:$0xff]
  %v541 = vld [vmem:[%s526 + $0x70] sm:$0xff]
  %v542 = vld [vmem:[%s526 + $0x78] sm:$0xff]
  %543 = vmatpush.msra.mxu0 %v542
  %544 = vmatpush.msra.mxu0 %v541
  %545 = vmatpush.msra.mxu0 %v540
  %546 = vmatpush.msra.mxu0 %v539
  %547 = vmatpush.msra.mxu0 %v538
  %548 = vmatpush.msra.mxu0 %v537
  %549 = vmatpush.msra.mxu0 %v536
  %550 = vmatpush.msra.mxu0 %v535
  %551 = vmatpush.msra.mxu0 %v534
  %552 = vmatpush.msra.mxu0 %v533
  %553 = vmatpush.msra.mxu0 %v532
  %554 = vmatpush.msra.mxu0 %v531
  %555 = vmatpush.msra.mxu0 %v530
  %556 = vmatpush.msra.mxu0 %v529
  %557 = vmatpush.msra.mxu0 %v528
  %558 = vmatpush.msra.mxu0 %v527
  %559 = vmatmul.f32.gmra.mxu0 %v441
  %v560 = vpop.f32.mrf.mxu0
  %v561 = vadd.f32 0.0, %v560
  %562 = vmatmul.f32.gmra.mxu0 %v444
  %v563 = vpop.f32.mrf.mxu0
  %v564 = vadd.f32 0.0, %v563
  %565 = vdwg.mxu0
  %v566 = vadd.f32 %v521, %v561
  %v567 = vadd.f32 %v524, %v564
  %s568 = scalar_lea.vmem %s9, 128
  %v569 = vld [vmem:[%s568] sm:$0xff]
  %v570 = vld [vmem:[%s568 + $0x8] sm:$0xff]
  %v571 = vld [vmem:[%s568 + $0x10] sm:$0xff]
  %v572 = vld [vmem:[%s568 + $0x18] sm:$0xff]
  %v573 = vld [vmem:[%s568 + $0x20] sm:$0xff]
  %v574 = vld [vmem:[%s568 + $0x28] sm:$0xff]
  %v575 = vld [vmem:[%s568 + $0x30] sm:$0xff]
  %v576 = vld [vmem:[%s568 + $0x38] sm:$0xff]
  %v577 = vld [vmem:[%s568 + $0x40] sm:$0xff]
  %v578 = vld [vmem:[%s568 + $0x48] sm:$0xff]
  %v579 = vld [vmem:[%s568 + $0x50] sm:$0xff]
  %v580 = vld [vmem:[%s568 + $0x58] sm:$0xff]
  %v581 = vld [vmem:[%s568 + $0x60] sm:$0xff]
  %v582 = vld [vmem:[%s568 + $0x68] sm:$0xff]
  %v583 = vld [vmem:[%s568 + $0x70] sm:$0xff]
  %v584 = vld [vmem:[%s568 + $0x78] sm:$0xff]
  %585 = vmatpush.msra.mxu0 %v584
  %586 = vmatpush.msra.mxu0 %v583
  %587 = vmatpush.msra.mxu0 %v582
  %588 = vmatpush.msra.mxu0 %v581
  %589 = vmatpush.msra.mxu0 %v580
  %590 = vmatpush.msra.mxu0 %v579
  %591 = vmatpush.msra.mxu0 %v578
  %592 = vmatpush.msra.mxu0 %v577
  %593 = vmatpush.msra.mxu0 %v576
  %594 = vmatpush.msra.mxu0 %v575
  %595 = vmatpush.msra.mxu0 %v574
  %596 = vmatpush.msra.mxu0 %v573
  %597 = vmatpush.msra.mxu0 %v572
  %598 = vmatpush.msra.mxu0 %v571
  %599 = vmatpush.msra.mxu0 %v570
  %600 = vmatpush.msra.mxu0 %v569
  %601 = vmatmul.f32.gmra.mxu0 %v409
  %v602 = vpop.f32.mrf.mxu0
  %v603 = vadd.f32 0.0, %v602
  %604 = vmatmul.f32.gmra.mxu0 %v410
  %v605 = vpop.f32.mrf.mxu0
  %v606 = vadd.f32 0.0, %v605
  %607 = vdwg.mxu0
  %v608 = vadd.f32 %v566, %v603
  %v609 = vadd.f32 %v567, %v606
  %s610 = scalar_lea.vmem %s10, 1
  %v611 = vld [vmem:[%s610] sm:$0x1]
  %v613 = vperm.slane %v611, 0
  %v615 = vadd.f32 %v608, %v613
  %v616 = vadd.f32 %v609, %v613
  %v617 = vsel %vm51, %v615, 0.0
  %v618 = vsel %vm52, %v616, 0.0
  %v619 = vadd.f32 %v617, %v618
  %v620 = vrot.slane %v619, 4
  %v621 = vadd.f32 %v619, %v620
  %v622 = vrot.slane %v621, 2
  %v623 = vadd.f32 %v621, %v622
  %v624 = vrot.slane %v623, 1
  %v625 = vadd.f32 %v623, %v624
  %v626 = vmul.f32 %v625, %v53
  %v627 = vsub.f32 %v615, %v626
  %v628 = vsub.f32 %v616, %v626
  %v629 = vmul.f32 %v627, %v627
  %v630 = vmul.f32 %v628, %v628
  %v631 = vsel %vm51, %v629, 0.0
  %v632 = vsel %vm52, %v630, 0.0
  %v633 = vadd.f32 %v631, %v632
  %v634 = vrot.slane %v633, 4
  %v635 = vadd.f32 %v633, %v634
  %v636 = vrot.slane %v635, 2
  %v637 = vadd.f32 %v635, %v636
  %v638 = vrot.slane %v637, 1
  %v639 = vadd.f32 %v637, %v638
  %v640 = vmul.f32 %v639, %v53
  %v641 = vadd.f32 %v640, 1e-05
  %v642 = vrsqrt.pop %v641
  %v643 = vmul.f32 %v642, %v641
  %v644 = vmul.f32 %v643, %v642
  %v645 = vmul.f32 0.5, %v644
  %v646 = vsub.f32 1.5, %v645
  %v647 = vmul.f32 %v642, %v646
  %vm648 = vweird.f32 %v641
  %vm649 = vweird.f32 %v642
  %vm650 = vmor %vm648, %vm649
  %v651 = vsel %vm650, %v642, %v647
  %v652 = vmul.f32 %v627, %v651
  %v653 = vmul.f32 %v628, %v651
  %s654 = scalar_lea.vmem %s11, 1
  %v655 = vld [vmem:[%s654] sm:$0x1]
  %v657 = vperm.slane %v655, 0
  %v659 = vmul.f32 %v652, %v657
  %v660 = vmul.f32 %v653, %v657
  %s661 = scalar_lea.vmem %s12, 1
  %v662 = vld [vmem:[%s661] sm:$0x1]
  %v664 = vperm.slane %v662, 0
  %v666 = vadd.f32 %v659, %v664
  %v667 = vadd.f32 %v660, %v664
  %v668 = vmax.f32 %v666, 0.0
  %v669 = vmax.f32 %v667, 0.0
  %v670 = vsel %vm51, %v668, 0.0
  %v671 = vsel %vm52, %v669, 0.0
  %672 = vmatpush.msra.mxu0 0.0
  %673 = vmatpush.msra.mxu0 0.0
  %674 = vmatpush.msra.mxu0 0.0
  %675 = vmatpush.msra.mxu0 0.0
  %676 = vmatpush.msra.mxu0 0.0
  %677 = vmatpush.msra.mxu0 0.0
  %678 = vmatpush.msra.mxu0 0.0
  %679 = vmatpush.msra.mxu0 0.0
  %680 = vmatpush.msra.mxu0 0.0
  %681 = vmatpush.msra.mxu0 0.0
  %682 = vmatpush.msra.mxu0 0.0
  %683 = vmatpush.msra.mxu0 0.0
  %684 = vmatpush.msra.mxu0 0.0
  %685 = vmatpush.msra.mxu0 0.0
  %686 = vmatpush.msra.mxu0 %v671
  %687 = vmatpush.msra.mxu0 %v670
  %688 = vmatmul.f32.gmra.mxu0 %v140
  %v689 = vpop.f32.mrf.mxu0
  %v690 = vadd.f32 0.0, %v689
  %691 = vmatmul.f32.gmra.mxu0 %v143
  %v692 = vpop.f32.mrf.mxu0
  %v693 = vadd.f32 0.0, %v692
  %694 = vmatmul.f32.gmra.mxu0 %v146
  %v695 = vpop.f32.mrf.mxu0
  %v696 = vadd.f32 0.0, %v695
  %697 = vmatmul.f32.gmra.mxu0 %v149
  %v698 = vpop.f32.mrf.mxu0
  %v699 = vadd.f32 0.0, %v698
  %700 = vmatmul.f32.gmra.mxu0 %v152
  %v701 = vpop.f32.mrf.mxu0
  %v702 = vadd.f32 0.0, %v701
  %703 = vmatmul.f32.gmra.mxu0 %v155
  %v704 = vpop.f32.mrf.mxu0
  %v705 = vadd.f32 0.0, %v704
  %706 = vdwg.mxu0
  %s707 = scalar_lea.vmem %s6, 256
  %v708 = vld [vmem:[%s707] sm:$0xff]
  %v709 = vld [vmem:[%s707 + $0x8] sm:$0xff]
  %v710 = vld [vmem:[%s707 + $0x10] sm:$0xff]
  %v711 = vld [vmem:[%s707 + $0x18] sm:$0xff]
  %v712 = vld [vmem:[%s707 + $0x20] sm:$0xff]
  %v713 = vld [vmem:[%s707 + $0x28] sm:$0xff]
  %v714 = vld [vmem:[%s707 + $0x30] sm:$0xff]
  %v715 = vld [vmem:[%s707 + $0x38] sm:$0xff]
  %v716 = vld [vmem:[%s707 + $0x40] sm:$0xff]
  %v717 = vld [vmem:[%s707 + $0x48] sm:$0xff]
  %v718 = vld [vmem:[%s707 + $0x50] sm:$0xff]
  %v719 = vld [vmem:[%s707 + $0x58] sm:$0xff]
  %v720 = vld [vmem:[%s707 + $0x60] sm:$0xff]
  %v721 = vld [vmem:[%s707 + $0x68] sm:$0xff]
  %v722 = vld [vmem:[%s707 + $0x70] sm:$0xff]
  %v723 = vld [vmem:[%s707 + $0x78] sm:$0xff]
  %s724 = scalar_lea.vmem %s7, 256
  %v725 = vld [vmem:[%s724] sm:$0xff]
  %v726 = vld [vmem:[%s724 + $0x8] sm:$0xff]
  %v727 = vld [vmem:[%s724 + $0x10] sm:$0xff]
  %v728 = vld [vmem:[%s724 + $0x18] sm:$0xff]
  %v729 = vld [vmem:[%s724 + $0x20] sm:$0xff]
  %v730 = vld [vmem:[%s724 + $0x28] sm:$0xff]
  %v731 = vld [vmem:[%s724 + $0x30] sm:$0xff]
  %v732 = vld [vmem:[%s724 + $0x38] sm:$0xff]
  %v733 = vld [vmem:[%s724 + $0x40] sm:$0xff]
  %v734 = vld [vmem:[%s724 + $0x48] sm:$0xff]
  %v735 = vld [vmem:[%s724 + $0x50] sm:$0xff]
  %v736 = vld [vmem:[%s724 + $0x58] sm:$0xff]
  %v737 = vld [vmem:[%s724 + $0x60] sm:$0xff]
  %v738 = vld [vmem:[%s724 + $0x68] sm:$0xff]
  %v739 = vld [vmem:[%s724 + $0x70] sm:$0xff]
  %v740 = vld [vmem:[%s724 + $0x78] sm:$0xff]
  %741 = vmatpush.msra.mxu0 %v740
  %742 = vmatpush.msra.mxu0 %v739
  %743 = vmatpush.msra.mxu0 %v738
  %744 = vmatpush.msra.mxu0 %v737
  %745 = vmatpush.msra.mxu0 %v736
  %746 = vmatpush.msra.mxu0 %v735
  %747 = vmatpush.msra.mxu0 %v734
  %748 = vmatpush.msra.mxu0 %v733
  %749 = vmatpush.msra.mxu0 %v732
  %750 = vmatpush.msra.mxu0 %v731
  %751 = vmatpush.msra.mxu0 %v730
  %752 = vmatpush.msra.mxu0 %v729
  %753 = vmatpush.msra.mxu0 %v728
  %754 = vmatpush.msra.mxu0 %v727
  %755 = vmatpush.msra.mxu0 %v726
  %756 = vmatpush.msra.mxu0 %v725
  %757 = vmatmul.f32.gmra.mxu0 %v696
  %v758 = vpop.f32.mrf.mxu0
  %v759 = vadd.f32 0.0, %v758
  %760 = vmatmul.f32.gmra.mxu0 %v699
  %v761 = vpop.f32.mrf.mxu0
  %v762 = vadd.f32 0.0, %v761
  %763 = vdwg.mxu0
  %764 = vmatpush.msra.mxu0 %v723
  %765 = vmatpush.msra.mxu0 %v722
  %766 = vmatpush.msra.mxu0 %v721
  %767 = vmatpush.msra.mxu0 %v720
  %768 = vmatpush.msra.mxu0 %v719
  %769 = vmatpush.msra.mxu0 %v718
  %770 = vmatpush.msra.mxu0 %v717
  %771 = vmatpush.msra.mxu0 %v716
  %772 = vmatpush.msra.mxu0 %v715
  %773 = vmatpush.msra.mxu0 %v714
  %774 = vmatpush.msra.mxu0 %v713
  %775 = vmatpush.msra.mxu0 %v712
  %776 = vmatpush.msra.mxu0 %v711
  %777 = vmatpush.msra.mxu0 %v710
  %778 = vmatpush.msra.mxu0 %v709
  %779 = vmatpush.msra.mxu0 %v708
  %780 = vmatmul.f32.gmra.mxu0 %v690
  %v781 = vpop.f32.mrf.mxu0
  %v782 = vadd.f32 %v759, %v781
  %783 = vmatmul.f32.gmra.mxu0 %v693
  %v784 = vpop.f32.mrf.mxu0
  %v785 = vadd.f32 %v762, %v784
  %786 = vdwg.mxu0
  %s787 = scalar_lea.vmem %s8, 256
  %v788 = vld [vmem:[%s787] sm:$0xff]
  %v789 = vld [vmem:[%s787 + $0x8] sm:$0xff]
  %v790 = vld [vmem:[%s787 + $0x10] sm:$0xff]
  %v791 = vld [vmem:[%s787 + $0x18] sm:$0xff]
  %v792 = vld [vmem:[%s787 + $0x20] sm:$0xff]
  %v793 = vld [vmem:[%s787 + $0x28] sm:$0xff]
  %v794 = vld [vmem:[%s787 + $0x30] sm:$0xff]
  %v795 = vld [vmem:[%s787 + $0x38] sm:$0xff]
  %v796 = vld [vmem:[%s787 + $0x40] sm:$0xff]
  %v797 = vld [vmem:[%s787 + $0x48] sm:$0xff]
  %v798 = vld [vmem:[%s787 + $0x50] sm:$0xff]
  %v799 = vld [vmem:[%s787 + $0x58] sm:$0xff]
  %v800 = vld [vmem:[%s787 + $0x60] sm:$0xff]
  %v801 = vld [vmem:[%s787 + $0x68] sm:$0xff]
  %v802 = vld [vmem:[%s787 + $0x70] sm:$0xff]
  %v803 = vld [vmem:[%s787 + $0x78] sm:$0xff]
  %804 = vmatpush.msra.mxu0 %v803
  %805 = vmatpush.msra.mxu0 %v802
  %806 = vmatpush.msra.mxu0 %v801
  %807 = vmatpush.msra.mxu0 %v800
  %808 = vmatpush.msra.mxu0 %v799
  %809 = vmatpush.msra.mxu0 %v798
  %810 = vmatpush.msra.mxu0 %v797
  %811 = vmatpush.msra.mxu0 %v796
  %812 = vmatpush.msra.mxu0 %v795
  %813 = vmatpush.msra.mxu0 %v794
  %814 = vmatpush.msra.mxu0 %v793
  %815 = vmatpush.msra.mxu0 %v792
  %816 = vmatpush.msra.mxu0 %v791
  %817 = vmatpush.msra.mxu0 %v790
  %818 = vmatpush.msra.mxu0 %v789
  %819 = vmatpush.msra.mxu0 %v788
  %820 = vmatmul.f32.gmra.mxu0 %v702
  %v821 = vpop.f32.mrf.mxu0
  %v822 = vadd.f32 0.0, %v821
  %823 = vmatmul.f32.gmra.mxu0 %v705
  %v824 = vpop.f32.mrf.mxu0
  %v825 = vadd.f32 0.0, %v824
  %826 = vdwg.mxu0
  %v827 = vadd.f32 %v782, %v822
  %v828 = vadd.f32 %v785, %v825
  %s829 = scalar_lea.vmem %s9, 256
  %v830 = vld [vmem:[%s829] sm:$0xff]
  %v831 = vld [vmem:[%s829 + $0x8] sm:$0xff]
  %v832 = vld [vmem:[%s829 + $0x10] sm:$0xff]
  %v833 = vld [vmem:[%s829 + $0x18] sm:$0xff]
  %v834 = vld [vmem:[%s829 + $0x20] sm:$0xff]
  %v835 = vld [vmem:[%s829 + $0x28] sm:$0xff]
  %v836 = vld [vmem:[%s829 + $0x30] sm:$0xff]
  %v837 = vld [vmem:[%s829 + $0x38] sm:$0xff]
  %v838 = vld [vmem:[%s829 + $0x40] sm:$0xff]
  %v839 = vld [vmem:[%s829 + $0x48] sm:$0xff]
  %v840 = vld [vmem:[%s829 + $0x50] sm:$0xff]
  %v841 = vld [vmem:[%s829 + $0x58] sm:$0xff]
  %v842 = vld [vmem:[%s829 + $0x60] sm:$0xff]
  %v843 = vld [vmem:[%s829 + $0x68] sm:$0xff]
  %v844 = vld [vmem:[%s829 + $0x70] sm:$0xff]
  %v845 = vld [vmem:[%s829 + $0x78] sm:$0xff]
  %846 = vmatpush.msra.mxu0 %v845
  %847 = vmatpush.msra.mxu0 %v844
  %848 = vmatpush.msra.mxu0 %v843
  %849 = vmatpush.msra.mxu0 %v842
  %850 = vmatpush.msra.mxu0 %v841
  %851 = vmatpush.msra.mxu0 %v840
  %852 = vmatpush.msra.mxu0 %v839
  %853 = vmatpush.msra.mxu0 %v838
  %854 = vmatpush.msra.mxu0 %v837
  %855 = vmatpush.msra.mxu0 %v836
  %856 = vmatpush.msra.mxu0 %v835
  %857 = vmatpush.msra.mxu0 %v834
  %858 = vmatpush.msra.mxu0 %v833
  %859 = vmatpush.msra.mxu0 %v832
  %860 = vmatpush.msra.mxu0 %v831
  %861 = vmatpush.msra.mxu0 %v830
  %862 = vmatmul.f32.gmra.mxu0 %v670
  %v863 = vpop.f32.mrf.mxu0
  %v864 = vadd.f32 0.0, %v863
  %865 = vmatmul.f32.gmra.mxu0 %v671
  %v866 = vpop.f32.mrf.mxu0
  %v867 = vadd.f32 0.0, %v866
  %868 = vdwg.mxu0
  %v869 = vadd.f32 %v827, %v864
  %v870 = vadd.f32 %v828, %v867
  %s871 = scalar_lea.vmem %s10, 2
  %v872 = vld [vmem:[%s871] sm:$0x1]
  %v874 = vperm.slane %v872, 0
  %v876 = vadd.f32 %v869, %v874
  %v877 = vadd.f32 %v870, %v874
  %v878 = vsel %vm51, %v876, 0.0
  %v879 = vsel %vm52, %v877, 0.0
  %v880 = vadd.f32 %v878, %v879
  %v881 = vrot.slane %v880, 4
  %v882 = vadd.f32 %v880, %v881
  %v883 = vrot.slane %v882, 2
  %v884 = vadd.f32 %v882, %v883
  %v885 = vrot.slane %v884, 1
  %v886 = vadd.f32 %v884, %v885
  %v887 = vmul.f32 %v886, %v53
  %v888 = vsub.f32 %v876, %v887
  %v889 = vsub.f32 %v877, %v887
  %v890 = vmul.f32 %v888, %v888
  %v891 = vmul.f32 %v889, %v889
  %v892 = vsel %vm51, %v890, 0.0
  %v893 = vsel %vm52, %v891, 0.0
  %v894 = vadd.f32 %v892, %v893
  %v895 = vrot.slane %v894, 4
  %v896 = vadd.f32 %v894, %v895
  %v897 = vrot.slane %v896, 2
  %v898 = vadd.f32 %v896, %v897
  %v899 = vrot.slane %v898, 1
  %v900 = vadd.f32 %v898, %v899
  %v901 = vmul.f32 %v900, %v53
  %v902 = vadd.f32 %v901, 1e-05
  %v903 = vrsqrt.pop %v902
  %v904 = vmul.f32 %v903, %v902
  %v905 = vmul.f32 %v904, %v903
  %v906 = vmul.f32 0.5, %v905
  %v907 = vsub.f32 1.5, %v906
  %v908 = vmul.f32 %v903, %v907
  %vm909 = vweird.f32 %v902
  %vm910 = vweird.f32 %v903
  %vm911 = vmor %vm909, %vm910
  %v912 = vsel %vm911, %v903, %v908
  %v913 = vmul.f32 %v888, %v912
  %v914 = vmul.f32 %v889, %v912
  %s915 = scalar_lea.vmem %s11, 2
  %v916 = vld [vmem:[%s915] sm:$0x1]
  %v918 = vperm.slane %v916, 0
  %v920 = vmul.f32 %v913, %v918
  %v921 = vmul.f32 %v914, %v918
  %s922 = scalar_lea.vmem %s12, 2
  %v923 = vld [vmem:[%s922] sm:$0x1]
  %v925 = vperm.slane %v923, 0
  %v927 = vadd.f32 %v920, %v925
  %v928 = vadd.f32 %v921, %v925
  %v929 = vmax.f32 %v927, 0.0
  %v930 = vmax.f32 %v928, 0.0
  %v931 = vsel %vm51, %v929, 0.0
  %v932 = vsel %vm52, %v930, 0.0
  %933 = vst [vmem:[%s13] sm:$0xff] %v931
  %934 = vst [vmem:[%s13 + $0x8] sm:$0xff] %v932
  // Predicated region
  $region54: #{hetero_graphsage_forward.1} parent=0 // pred_check
    _
  $region55: #{hetero_graphsage_forward.1} parent=0 // pred_check_branch
    %936 = sbr.rel (0) target = $region57
  $region56: #{hetero_graphsage_forward.1} parent=0 // pred_region
    _
  $region57: #{hetero_graphsage_forward.1} parent=0 // pred_fallthru
    _
  // Predicated region
  $region58: #{hetero_graphsage_forward.1} parent=0 // pred_check
    _
  $region59: #{hetero_graphsage_forward.1} parent=0 // pred_check_branch
    %938 = sbr.rel (0) target = $region61
  $region60: #{hetero_graphsage_forward.1} parent=0 // pred_region
    _
  $region61: #{hetero_graphsage_forward.1} parent=0 // pred_fallthru
    _

</llo_original>
